<compile_context>
chip_gen: v5e
topology: v5e:2x2
jax: 0.10.0
libtpu: 0.0.40
codegen_flags: <defaults>
</compile_context>

<pallas_src>
import functools

import jax
import jax.numpy as jnp
from jax.experimental import pallas as pl
from jax.experimental.pallas import tpu as pltpu

EPS = 1e-5  # nn.GroupNorm default eps


# ----------------------------- fused Pallas kernel -----------------------------

def _upblock_kernel(x_ref, t_ref,
                    g1_ref, be1_ref, p1_ref, w1_ref, c1b_ref, wt_ref,
                    g2_ref, be2_ref, p2_ref, w2sc_ref, c2b_ref,
                    wv_ref, vb_ref, wo_ref, ob_ref,
                    o_ref, *, h, w, cin, cout):
    """Whole UpBlock forward for one batch element, entirely in VMEM."""
    hw = h * w
    f32 = jnp.float32

    def gn_silu(z, gamma, beta, p):
        # GroupNorm (biased variance, eps=1e-5) + SiLU on (HW, C).
        # Group statistics via the precomputed (C, C) group-averaging matrix.
        mu_c = jnp.mean(z, axis=0, keepdims=True)                      # (1, C)
        mu = jnp.dot(mu_c, p, preferred_element_type=f32)              # (1, C)
        d = z - mu
        var_c = jnp.mean(d * d, axis=0, keepdims=True)                 # (1, C)
        var = jnp.dot(var_c, p, preferred_element_type=f32)            # (1, C)
        y = d * jax.lax.rsqrt(var + EPS) * gamma + beta
        return y * jax.nn.sigmoid(y)                                   # SiLU

    def im2col(z, c):
        # z: (HW, C) -> zero-padded 3x3 patch matrix (HW, 9*C), built in VMEM.
        img = z.reshape(h, w, c)
        zr = jnp.zeros((1, w, c), f32)
        img = jnp.concatenate([zr, img, zr], axis=0)                   # (h+2, w,   c)
        zc = jnp.zeros((h + 2, 1, c), f32)
        img = jnp.concatenate([zc, img, zc], axis=1)                   # (h+2, w+2, c)
        cols = [img[ky:ky + h, kx:kx + w, :].reshape(hw, c)
                for ky in range(3) for kx in range(3)]
        return jnp.concatenate(cols, axis=1)                           # (HW, 9C)

    x0 = x_ref[0].astype(f32).T                                        # (HW, Cin)
    t_row = t_ref[0].astype(f32)                                       # (1, Tc)

    # ---- ResidualBlock: norm_1 -> SiLU -> conv_1 (+ bias + time embedding) ----
    h1 = gn_silu(x0, g1_ref[...], be1_ref[...], p1_ref[...])
    t_emb = jnp.dot(t_row, wt_ref[...], preferred_element_type=f32)    # (1, Cout)
    h2 = (jnp.dot(im2col(h1, cin), w1_ref[...], preferred_element_type=f32)
          + c1b_ref[...] + t_emb)                                      # (HW, Cout)

    # ---- norm_2 -> SiLU -> conv_2 fused with the 1x1 shortcut (K concat) ----
    h3 = gn_silu(h2, g2_ref[...], be2_ref[...], p2_ref[...])
    lhs2 = jnp.concatenate([im2col(h3, cout), x0], axis=1)             # (HW, 9*Cout+Cin)
    h4 = (jnp.dot(lhs2, w2sc_ref[...], preferred_element_type=f32)
          + c2b_ref[...])                                              # (HW, Cout)

    # ---- AttentionBlock (n_heads=1): softmax over the size-1 head axis is
    #      identically 1, so res[i] = sum_j v[j]; q/k never affect the output.
    v = jnp.dot(h4, wv_ref[...], preferred_element_type=f32) + vb_ref[...]
    v_sum = jnp.sum(v, axis=0, keepdims=True)                          # (1, Cout)
    attn_add = (jnp.dot(v_sum, wo_ref[...], preferred_element_type=f32)
                + ob_ref[...])                                         # (1, Cout)
    out = h4 + attn_add                                                # (HW, Cout)

    # Store channels-first so the wrapper only needs a free reshape to NCHW;
    # the lane dimension of the store is HW (64) instead of Cout (8).
    o_ref[0] = out.T.astype(o_ref.dtype)                               # (Cout, HW)


# ----------------------------- wrapper -----------------------------

def _group_avg_matrix(c, n_groups):
    """P[c', c] = 1/group_size if c', c are in the same group else 0."""
    cg = c // n_groups
    gid = jnp.arange(c, dtype=jnp.int32) // cg
    return (gid[:, None] == gid[None, :]).astype(jnp.float32) / cg


def upblock_forward(x_nchw, t, p, n_groups):
    """UpBlock.forward: ResidualBlock(x, t) then AttentionBlock. NCHW in/out."""
    B, Cin, H, W = x_nchw.shape
    HW = H * W
    Cout = p['w1'].shape[-1]
    Tc = p['wt'].shape[0]

    # Free reshapes only (no HBM transposes / pads in the wrapper).
    x_flat = x_nchw.reshape(B, Cin, HW)
    t3 = t.reshape(B, 1, Tc)

    # Precomputed / pre-fused parameters.
    p1 = _group_avg_matrix(Cin, n_groups)
    p2 = _group_avg_matrix(Cout, n_groups)
    w1 = p['w1'].reshape(9 * Cin, Cout)                       # im2col conv_1 weight
    c1b = (p['b1'] + p['bt']).reshape(1, Cout)                # conv_1 bias + time bias
    w2sc = jnp.concatenate(                                   # conv_2 ⊕ shortcut along K
        [p['w2'].reshape(9 * Cout, Cout), p['wsc']], axis=0)  # (9*Cout + Cin, Cout)
    c2b = (p['b2'] + p['bsc']).reshape(1, Cout)               # conv_2 bias + shortcut bias
    wv = p['wqkv'][:, 2 * Cout:]                              # only the v slice is needed
    vb = p['bqkv'][2 * Cout:].reshape(1, Cout)

    kernel = functools.partial(_upblock_kernel, h=H, w=W, cin=Cin, cout=Cout)

    def rep(shape):  # replicated (weight / per-channel) operand
        return pl.BlockSpec(shape, lambda i: (0,) * len(shape))

    out = pl.pallas_call(
        kernel,
        out_shape=jax.ShapeDtypeStruct((B, Cout, HW), x_nchw.dtype),
        grid=(B,),
        in_specs=[
            pl.BlockSpec((1, Cin, HW), lambda i: (i, 0, 0)),   # x (channels-first)
            pl.BlockSpec((1, 1, Tc), lambda i: (i, 0, 0)),     # t
            rep((1, Cin)), rep((1, Cin)), rep((Cin, Cin)),     # gamma1, beta1, P1
            rep((9 * Cin, Cout)), rep((1, Cout)), rep((Tc, Cout)),   # w1, b1+bt, wt
            rep((1, Cout)), rep((1, Cout)), rep((Cout, Cout)), # gamma2, beta2, P2
            rep((9 * Cout + Cin, Cout)), rep((1, Cout)),       # [w2; wsc], b2+bsc
            rep((Cout, Cout)), rep((1, Cout)),                 # wv, bv
            rep((Cout, Cout)), rep((1, Cout)),                 # wo, bo
        ],
        out_specs=pl.BlockSpec((1, Cout, HW), lambda i: (i, 0, 0)),
        compiler_params=pltpu.CompilerParams(
            dimension_semantics=("parallel",),                 # B=2 -> both v7x TCs busy
            vmem_limit_bytes=32 * 1024 * 1024),                # explicit, safe on v5e/v6e/v7x
    )(x_flat, t3,
      p['gamma1'].reshape(1, Cin), p['beta1'].reshape(1, Cin), p1,
      w1, c1b, p['wt'],
      p['gamma2'].reshape(1, Cout), p['beta2'].reshape(1, Cout), p2,
      w2sc, c2b,
      wv, vb, p['wo'], p['bo'].reshape(1, Cout))

    return out.reshape(B, Cout, H, W)


# ----------------------------- params & reference -----------------------------

def init_params(key, in_channels, out_channels, time_channels):
    c_res_in = in_channels + out_channels
    keys = jax.random.split(key, 16)

    def rnd(k, shape, scale):
        return scale * jax.random.normal(k, shape, jnp.float32)

    p = dict(
        gamma1=1.0 + 0.1 * jax.random.normal(keys[0], (c_res_in,), jnp.float32),
        beta1=rnd(keys[1], (c_res_in,), 0.1),
        w1=rnd(keys[2], (3, 3, c_res_in, out_channels), 0.15),
        b1=rnd(keys[3], (out_channels,), 0.05),
        wt=rnd(keys[4], (time_channels, out_channels), 0.15),
        bt=rnd(keys[5], (out_channels,), 0.05),
        gamma2=1.0 + 0.1 * jax.random.normal(keys[6], (out_channels,), jnp.float32),
        beta2=rnd(keys[7], (out_channels,), 0.1),
        w2=rnd(keys[8], (3, 3, out_channels, out_channels), 0.15),
        b2=rnd(keys[9], (out_channels,), 0.05),
        wsc=rnd(keys[10], (c_res_in, out_channels), 0.2),
        bsc=rnd(keys[11], (out_channels,), 0.05),
        wqkv=rnd(keys[12], (out_channels, 3 * out_channels), 0.2),
        bqkv=rnd(keys[13], (3 * out_channels,), 0.05),
        wo=rnd(keys[14], (out_channels, out_channels), 0.2),
        bo=rnd(keys[15], (out_channels,), 0.05),
    )
    return {k: v.astype(jnp.float32) for k, v in p.items()}


def ref_upblock_forward(x, t, p, n_groups):
    """Pure-JAX mirror of the PyTorch forward (NCHW), high precision."""
    hp = jax.lax.Precision.HIGHEST

    def group_norm(z, gamma, beta):
        b, c, hh, ww = z.shape
        zg = z.reshape(b, n_groups, c // n_groups, hh, ww)
        m = zg.mean(axis=(2, 3, 4), keepdims=True)
        v = ((zg - m) ** 2).mean(axis=(2, 3, 4), keepdims=True)
        zn = ((zg - m) / jnp.sqrt(v + EPS)).reshape(b, c, hh, ww)
        return zn * gamma[None, :, None, None] + beta[None, :, None, None]

    def silu(z):
        return jax.nn.sigmoid(z) * z

    def conv3x3(z, w, bias):
        out = jax.lax.conv_general_dilated(
            z, w, (1, 1), 'SAME',
            dimension_numbers=('NCHW', 'HWIO', 'NCHW'), precision=hp)
        return out + bias[None, :, None, None]

    h = conv3x3(silu(group_norm(x, p['gamma1'], p['beta1'])), p['w1'], p['b1'])
    h = h + (jnp.dot(t, p['wt'], precision=hp) + p['bt'])[:, :, None, None]
    h = conv3x3(silu(group_norm(h, p['gamma2'], p['beta2'])), p['w2'], p['b2'])
    h = h + jnp.einsum('bchw,co->bohw', x, p['wsc'], precision=hp) \
          + p['bsc'][None, :, None, None]

    # AttentionBlock (n_heads=1, d_k=C); its GroupNorm is never applied.
    b, c, hh, ww = h.shape
    xx = h.reshape(b, c, -1).transpose(0, 2, 1)                 # (B, HW, C)
    qkv = jnp.dot(xx, p['wqkv'], precision=hp) + p['bqkv']
    q, k, v = jnp.split(qkv, 3, axis=-1)
    s = jnp.einsum('bid,bjd->bij', q, k, precision=hp) * (c ** -0.5)
    attn = jnp.ones_like(s)      # softmax over the size-1 head axis -> all ones
    res = jnp.einsum('bij,bjd->bid', attn, v, precision=hp)
    out = jnp.dot(res, p['wo'], precision=hp) + p['bo'] + xx
    return out.transpose(0, 2, 1).reshape(b, c, hh, ww)


# ----------------------------- main -----------------------------

if __name__ == "__main__":
    B, H, W = 2, 8, 8
    in_channels, out_channels, time_channels, n_groups = 4, 8, 16, 4

    key = jax.random.PRNGKey(0)
    kx, kt, kp = jax.random.split(key, 3)
    # UpBlock input channels = in_channels + out_channels (skip-concat convention)
    x = jax.random.normal(kx, (B, in_channels + out_channels, H, W), jnp.float32)
    t = jax.random.normal(kt, (B, time_channels), jnp.float32)
    params = init_params(kp, in_channels, out_channels, time_channels)

    out = upblock_forward(x, t, params, n_groups)
    out = jax.block_until_ready(out)

    ref = ref_upblock_forward(x, t, params, n_groups)
    err = float(jnp.max(jnp.abs(out - ref)) / (jnp.max(jnp.abs(ref)) + 1e-6))
    assert out.shape == (B, out_channels, H, W), out.shape
    assert err < 1e-2, f"mismatch: normalized max error {err}"
    print("KERNEL_OK")
</pallas_src>

<mosaic_0001>
module attributes {stable_mosaic.version = 11 : i64} {
  func.func @_upblock_kernel(%arg0: i32, %arg1: memref<1x12x64xf32, #tpu.memory_space<vmem>>, %arg2: memref<1x1x16xf32, #tpu.memory_space<vmem>>, %arg3: memref<1x12xf32, #tpu.memory_space<vmem>>, %arg4: memref<1x12xf32, #tpu.memory_space<vmem>>, %arg5: memref<12x12xf32, #tpu.memory_space<vmem>>, %arg6: memref<108x8xf32, #tpu.memory_space<vmem>>, %arg7: memref<1x8xf32, #tpu.memory_space<vmem>>, %arg8: memref<16x8xf32, #tpu.memory_space<vmem>>, %arg9: memref<1x8xf32, #tpu.memory_space<vmem>>, %arg10: memref<1x8xf32, #tpu.memory_space<vmem>>, %arg11: memref<8x8xf32, #tpu.memory_space<vmem>>, %arg12: memref<84x8xf32, #tpu.memory_space<vmem>>, %arg13: memref<1x8xf32, #tpu.memory_space<vmem>>, %arg14: memref<8x8xf32, #tpu.memory_space<vmem>>, %arg15: memref<1x8xf32, #tpu.memory_space<vmem>>, %arg16: memref<8x8xf32, #tpu.memory_space<vmem>>, %arg17: memref<1x8xf32, #tpu.memory_space<vmem>>, %arg18: memref<1x8x64xf32, #tpu.memory_space<vmem>>) attributes {dimension_semantics = [#tpu.dimension_semantics<parallel>], iteration_bounds = array<i64: 2>, scalar_prefetch = 0 : i64, scratch_operands = 0 : i64, tpu.core_type = #tpu.core_type<tc>, window_params = [{transform_indices = @transform_0, window_bounds = array<i64: 1, 12, 64>}, {transform_indices = @transform_1, window_bounds = array<i64: 1, 1, 16>}, {pipeline_mode = #tpu.pipeline_mode<synchronous>, transform_indices = @transform_2, window_bounds = array<i64: 1, 12>}, {pipeline_mode = #tpu.pipeline_mode<synchronous>, transform_indices = @transform_3, window_bounds = array<i64: 1, 12>}, {pipeline_mode = #tpu.pipeline_mode<synchronous>, transform_indices = @transform_4, window_bounds = array<i64: 12, 12>}, {pipeline_mode = #tpu.pipeline_mode<synchronous>, transform_indices = @transform_5, window_bounds = array<i64: 108, 8>}, {pipeline_mode = #tpu.pipeline_mode<synchronous>, transform_indices = @transform_6, window_bounds = array<i64: 1, 8>}, {pipeline_mode = #tpu.pipeline_mode<synchronous>, transform_indices = @transform_7, window_bounds = array<i64: 16, 8>}, {pipeline_mode = #tpu.pipeline_mode<synchronous>, transform_indices = @transform_8, window_bounds = array<i64: 1, 8>}, {pipeline_mode = #tpu.pipeline_mode<synchronous>, transform_indices = @transform_9, window_bounds = array<i64: 1, 8>}, {pipeline_mode = #tpu.pipeline_mode<synchronous>, transform_indices = @transform_10, window_bounds = array<i64: 8, 8>}, {pipeline_mode = #tpu.pipeline_mode<synchronous>, transform_indices = @transform_11, window_bounds = array<i64: 84, 8>}, {pipeline_mode = #tpu.pipeline_mode<synchronous>, transform_indices = @transform_12, window_bounds = array<i64: 1, 8>}, {pipeline_mode = #tpu.pipeline_mode<synchronous>, transform_indices = @transform_13, window_bounds = array<i64: 8, 8>}, {pipeline_mode = #tpu.pipeline_mode<synchronous>, transform_indices = @transform_14, window_bounds = array<i64: 1, 8>}, {pipeline_mode = #tpu.pipeline_mode<synchronous>, transform_indices = @transform_15, window_bounds = array<i64: 8, 8>}, {pipeline_mode = #tpu.pipeline_mode<synchronous>, transform_indices = @transform_16, window_bounds = array<i64: 1, 8>}, {transform_indices = @transform_17, window_bounds = array<i64: 1, 8, 64>}]} {
    %c0 = arith.constant 0 : index
    %c0_0 = arith.constant 0 : index
    %c0_1 = arith.constant 0 : index
    %0 = vector.load %arg1[%c0, %c0_0, %c0_1] : memref<1x12x64xf32, #tpu.memory_space<vmem>>, vector<1x12x64xf32>
    %1 = vector.shape_cast %0 : vector<1x12x64xf32> to vector<12x64xf32>
    %2 = tpu.transpose %1, [1, 0] : vector<12x64xf32> -> vector<64x12xf32>
    %c0_2 = arith.constant 0 : index
    %c0_3 = arith.constant 0 : index
    %c0_4 = arith.constant 0 : index
    %3 = vector.load %arg2[%c0_2, %c0_3, %c0_4] : memref<1x1x16xf32, #tpu.memory_space<vmem>>, vector<1x1x16xf32>
    %4 = vector.shape_cast %3 : vector<1x1x16xf32> to vector<1x16xf32>
    %c0_5 = arith.constant 0 : index
    %c0_6 = arith.constant 0 : index
    %5 = vector.load %arg3[%c0_5, %c0_6] : memref<1x12xf32, #tpu.memory_space<vmem>>, vector<1x12xf32>
    %c0_7 = arith.constant 0 : index
    %c0_8 = arith.constant 0 : index
    %6 = vector.load %arg4[%c0_7, %c0_8] : memref<1x12xf32, #tpu.memory_space<vmem>>, vector<1x12xf32>
    %c0_9 = arith.constant 0 : index
    %c0_10 = arith.constant 0 : index
    %7 = vector.load %arg5[%c0_9, %c0_10] : memref<12x12xf32, #tpu.memory_space<vmem>>, vector<12x12xf32>
    %cst = arith.constant dense<0.000000e+00> : vector<12xf32>
    %8 = vector.multi_reduction <add>, %2, %cst [0] : vector<64x12xf32> to vector<12xf32>
    %9 = vector.shape_cast %8 : vector<12xf32> to vector<1x12xf32>
    %cst_11 = arith.constant 6.400000e+01 : f32
    %10 = vector.broadcast %cst_11 : f32 to vector<1x12xf32>
    %11 = arith.divf %9, %10 : vector<1x12xf32>
    %cst_12 = arith.constant dense<0.000000e+00> : vector<1x12xf32>
    %12 = tpu.matmul %11, %7, %cst_12 {dimension_numbers = #tpu.dot_dimension_numbers<[1], [0], [0], [1], [0, 0, 1, 1], [], []>} : vector<1x12xf32>, vector<12x12xf32>, vector<1x12xf32> -> vector<1x12xf32>
    %13 = vector.broadcast %12 : vector<1x12xf32> to vector<64x12xf32>
    %14 = arith.subf %2, %13 : vector<64x12xf32>
    %15 = arith.mulf %14, %14 : vector<64x12xf32>
    %cst_13 = arith.constant dense<0.000000e+00> : vector<12xf32>
    %16 = vector.multi_reduction <add>, %15, %cst_13 [0] : vector<64x12xf32> to vector<12xf32>
    %17 = vector.shape_cast %16 : vector<12xf32> to vector<1x12xf32>
    %cst_14 = arith.constant 6.400000e+01 : f32
    %18 = vector.broadcast %cst_14 : f32 to vector<1x12xf32>
    %19 = arith.divf %17, %18 : vector<1x12xf32>
    %cst_15 = arith.constant dense<0.000000e+00> : vector<1x12xf32>
    %20 = tpu.matmul %19, %7, %cst_15 {dimension_numbers = #tpu.dot_dimension_numbers<[1], [0], [0], [1], [0, 0, 1, 1], [], []>} : vector<1x12xf32>, vector<12x12xf32>, vector<1x12xf32> -> vector<1x12xf32>
    %cst_16 = arith.constant 9.99999974E-6 : f32
    %21 = vector.broadcast %cst_16 : f32 to vector<1x12xf32>
    %22 = arith.addf %20, %21 : vector<1x12xf32>
    %23 = math.rsqrt %22 : vector<1x12xf32>
    %24 = vector.broadcast %23 : vector<1x12xf32> to vector<64x12xf32>
    %25 = arith.mulf %14, %24 : vector<64x12xf32>
    %26 = vector.broadcast %5 : vector<1x12xf32> to vector<64x12xf32>
    %27 = arith.mulf %25, %26 : vector<64x12xf32>
    %28 = vector.broadcast %6 : vector<1x12xf32> to vector<64x12xf32>
    %29 = arith.addf %27, %28 : vector<64x12xf32>
    %30 = arith.negf %29 : vector<64x12xf32>
    %31 = math.exp %30 : vector<64x12xf32>
    %cst_17 = arith.constant 1.000000e+00 : f32
    %32 = vector.broadcast %cst_17 : f32 to vector<64x12xf32>
    %33 = arith.addf %32, %31 : vector<64x12xf32>
    %34 = arith.divf %32, %33 : vector<64x12xf32>
    %35 = arith.mulf %29, %34 : vector<64x12xf32>
    %c0_18 = arith.constant 0 : index
    %c0_19 = arith.constant 0 : index
    %36 = vector.load %arg8[%c0_18, %c0_19] : memref<16x8xf32, #tpu.memory_space<vmem>>, vector<16x8xf32>
    %cst_20 = arith.constant dense<0.000000e+00> : vector<1x8xf32>
    %37 = tpu.matmul %4, %36, %cst_20 {dimension_numbers = #tpu.dot_dimension_numbers<[1], [0], [0], [1], [0, 0, 1, 1], [], []>} : vector<1x16xf32>, vector<16x8xf32>, vector<1x8xf32> -> vector<1x8xf32>
    %38 = vector.shape_cast %35 : vector<64x12xf32> to vector<8x8x12xf32>
    %cst_21 = arith.constant 0.000000e+00 : f32
    %39 = vector.broadcast %cst_21 : f32 to vector<1x8x12xf32>
    %40 = tpu.concatenate %39, %38, %39 in 0 : vector<1x8x12xf32>, vector<8x8x12xf32>, vector<1x8x12xf32> -> vector<10x8x12xf32>
    %cst_22 = arith.constant 0.000000e+00 : f32
    %41 = vector.broadcast %cst_22 : f32 to vector<10x1x12xf32>
    %42 = tpu.concatenate %41, %40, %41 in 1 : vector<10x1x12xf32>, vector<10x8x12xf32>, vector<10x1x12xf32> -> vector<10x10x12xf32>
    %43 = vector.extract_strided_slice %42 {offsets = [0, 0, 0], sizes = [8, 8, 12], strides = [1, 1, 1]} : vector<10x10x12xf32> to vector<8x8x12xf32>
    %44 = vector.shape_cast %43 : vector<8x8x12xf32> to vector<64x12xf32>
    %45 = vector.extract_strided_slice %42 {offsets = [0, 1, 0], sizes = [8, 8, 12], strides = [1, 1, 1]} : vector<10x10x12xf32> to vector<8x8x12xf32>
    %46 = vector.shape_cast %45 : vector<8x8x12xf32> to vector<64x12xf32>
    %47 = vector.extract_strided_slice %42 {offsets = [0, 2, 0], sizes = [8, 8, 12], strides = [1, 1, 1]} : vector<10x10x12xf32> to vector<8x8x12xf32>
    %48 = vector.shape_cast %47 : vector<8x8x12xf32> to vector<64x12xf32>
    %49 = vector.extract_strided_slice %42 {offsets = [1, 0, 0], sizes = [8, 8, 12], strides = [1, 1, 1]} : vector<10x10x12xf32> to vector<8x8x12xf32>
    %50 = vector.shape_cast %49 : vector<8x8x12xf32> to vector<64x12xf32>
    %51 = vector.extract_strided_slice %42 {offsets = [1, 1, 0], sizes = [8, 8, 12], strides = [1, 1, 1]} : vector<10x10x12xf32> to vector<8x8x12xf32>
    %52 = vector.shape_cast %51 : vector<8x8x12xf32> to vector<64x12xf32>
    %53 = vector.extract_strided_slice %42 {offsets = [1, 2, 0], sizes = [8, 8, 12], strides = [1, 1, 1]} : vector<10x10x12xf32> to vector<8x8x12xf32>
    %54 = vector.shape_cast %53 : vector<8x8x12xf32> to vector<64x12xf32>
    %55 = vector.extract_strided_slice %42 {offsets = [2, 0, 0], sizes = [8, 8, 12], strides = [1, 1, 1]} : vector<10x10x12xf32> to vector<8x8x12xf32>
    %56 = vector.shape_cast %55 : vector<8x8x12xf32> to vector<64x12xf32>
    %57 = vector.extract_strided_slice %42 {offsets = [2, 1, 0], sizes = [8, 8, 12], strides = [1, 1, 1]} : vector<10x10x12xf32> to vector<8x8x12xf32>
    %58 = vector.shape_cast %57 : vector<8x8x12xf32> to vector<64x12xf32>
    %59 = vector.extract_strided_slice %42 {offsets = [2, 2, 0], sizes = [8, 8, 12], strides = [1, 1, 1]} : vector<10x10x12xf32> to vector<8x8x12xf32>
    %60 = vector.shape_cast %59 : vector<8x8x12xf32> to vector<64x12xf32>
    %61 = tpu.concatenate %44, %46, %48, %50, %52, %54, %56, %58, %60 in 1 : vector<64x12xf32>, vector<64x12xf32>, vector<64x12xf32>, vector<64x12xf32>, vector<64x12xf32>, vector<64x12xf32>, vector<64x12xf32>, vector<64x12xf32>, vector<64x12xf32> -> vector<64x108xf32>
    %c0_23 = arith.constant 0 : index
    %c0_24 = arith.constant 0 : index
    %62 = vector.load %arg6[%c0_23, %c0_24] : memref<108x8xf32, #tpu.memory_space<vmem>>, vector<108x8xf32>
    %cst_25 = arith.constant dense<0.000000e+00> : vector<64x8xf32>
    %63 = tpu.matmul %61, %62, %cst_25 {dimension_numbers = #tpu.dot_dimension_numbers<[1], [0], [0], [1], [0, 0, 1, 1], [], []>} : vector<64x108xf32>, vector<108x8xf32>, vector<64x8xf32> -> vector<64x8xf32>
    %c0_26 = arith.constant 0 : index
    %c0_27 = arith.constant 0 : index
    %64 = vector.load %arg7[%c0_26, %c0_27] : memref<1x8xf32, #tpu.memory_space<vmem>>, vector<1x8xf32>
    %65 = vector.broadcast %64 : vector<1x8xf32> to vector<64x8xf32>
    %66 = arith.addf %63, %65 : vector<64x8xf32>
    %67 = vector.broadcast %37 : vector<1x8xf32> to vector<64x8xf32>
    %68 = arith.addf %66, %67 : vector<64x8xf32>
    %c0_28 = arith.constant 0 : index
    %c0_29 = arith.constant 0 : index
    %69 = vector.load %arg9[%c0_28, %c0_29] : memref<1x8xf32, #tpu.memory_space<vmem>>, vector<1x8xf32>
    %c0_30 = arith.constant 0 : index
    %c0_31 = arith.constant 0 : index
    %70 = vector.load %arg10[%c0_30, %c0_31] : memref<1x8xf32, #tpu.memory_space<vmem>>, vector<1x8xf32>
    %c0_32 = arith.constant 0 : index
    %c0_33 = arith.constant 0 : index
    %71 = vector.load %arg11[%c0_32, %c0_33] : memref<8x8xf32, #tpu.memory_space<vmem>>, vector<8x8xf32>
    %cst_34 = arith.constant dense<0.000000e+00> : vector<8xf32>
    %72 = vector.multi_reduction <add>, %68, %cst_34 [0] : vector<64x8xf32> to vector<8xf32>
    %73 = vector.shape_cast %72 : vector<8xf32> to vector<1x8xf32>
    %cst_35 = arith.constant 6.400000e+01 : f32
    %74 = vector.broadcast %cst_35 : f32 to vector<1x8xf32>
    %75 = arith.divf %73, %74 : vector<1x8xf32>
    %cst_36 = arith.constant dense<0.000000e+00> : vector<1x8xf32>
    %76 = tpu.matmul %75, %71, %cst_36 {dimension_numbers = #tpu.dot_dimension_numbers<[1], [0], [0], [1], [0, 0, 1, 1], [], []>} : vector<1x8xf32>, vector<8x8xf32>, vector<1x8xf32> -> vector<1x8xf32>
    %77 = vector.broadcast %76 : vector<1x8xf32> to vector<64x8xf32>
    %78 = arith.subf %68, %77 : vector<64x8xf32>
    %79 = arith.mulf %78, %78 : vector<64x8xf32>
    %cst_37 = arith.constant dense<0.000000e+00> : vector<8xf32>
    %80 = vector.multi_reduction <add>, %79, %cst_37 [0] : vector<64x8xf32> to vector<8xf32>
    %81 = vector.shape_cast %80 : vector<8xf32> to vector<1x8xf32>
    %cst_38 = arith.constant 6.400000e+01 : f32
    %82 = vector.broadcast %cst_38 : f32 to vector<1x8xf32>
    %83 = arith.divf %81, %82 : vector<1x8xf32>
    %cst_39 = arith.constant dense<0.000000e+00> : vector<1x8xf32>
    %84 = tpu.matmul %83, %71, %cst_39 {dimension_numbers = #tpu.dot_dimension_numbers<[1], [0], [0], [1], [0, 0, 1, 1], [], []>} : vector<1x8xf32>, vector<8x8xf32>, vector<1x8xf32> -> vector<1x8xf32>
    %cst_40 = arith.constant 9.99999974E-6 : f32
    %85 = vector.broadcast %cst_40 : f32 to vector<1x8xf32>
    %86 = arith.addf %84, %85 : vector<1x8xf32>
    %87 = math.rsqrt %86 : vector<1x8xf32>
    %88 = vector.broadcast %87 : vector<1x8xf32> to vector<64x8xf32>
    %89 = arith.mulf %78, %88 : vector<64x8xf32>
    %90 = vector.broadcast %69 : vector<1x8xf32> to vector<64x8xf32>
    %91 = arith.mulf %89, %90 : vector<64x8xf32>
    %92 = vector.broadcast %70 : vector<1x8xf32> to vector<64x8xf32>
    %93 = arith.addf %91, %92 : vector<64x8xf32>
    %94 = arith.negf %93 : vector<64x8xf32>
    %95 = math.exp %94 : vector<64x8xf32>
    %cst_41 = arith.constant 1.000000e+00 : f32
    %96 = vector.broadcast %cst_41 : f32 to vector<64x8xf32>
    %97 = arith.addf %96, %95 : vector<64x8xf32>
    %98 = arith.divf %96, %97 : vector<64x8xf32>
    %99 = arith.mulf %93, %98 : vector<64x8xf32>
    %100 = vector.shape_cast %99 : vector<64x8xf32> to vector<8x8x8xf32>
    %cst_42 = arith.constant 0.000000e+00 : f32
    %101 = vector.broadcast %cst_42 : f32 to vector<1x8x8xf32>
    %102 = tpu.concatenate %101, %100, %101 in 0 : vector<1x8x8xf32>, vector<8x8x8xf32>, vector<1x8x8xf32> -> vector<10x8x8xf32>
    %cst_43 = arith.constant 0.000000e+00 : f32
    %103 = vector.broadcast %cst_43 : f32 to vector<10x1x8xf32>
    %104 = tpu.concatenate %103, %102, %103 in 1 : vector<10x1x8xf32>, vector<10x8x8xf32>, vector<10x1x8xf32> -> vector<10x10x8xf32>
    %105 = vector.extract_strided_slice %104 {offsets = [0, 0, 0], sizes = [8, 8, 8], strides = [1, 1, 1]} : vector<10x10x8xf32> to vector<8x8x8xf32>
    %106 = vector.shape_cast %105 : vector<8x8x8xf32> to vector<64x8xf32>
    %107 = vector.extract_strided_slice %104 {offsets = [0, 1, 0], sizes = [8, 8, 8], strides = [1, 1, 1]} : vector<10x10x8xf32> to vector<8x8x8xf32>
    %108 = vector.shape_cast %107 : vector<8x8x8xf32> to vector<64x8xf32>
    %109 = vector.extract_strided_slice %104 {offsets = [0, 2, 0], sizes = [8, 8, 8], strides = [1, 1, 1]} : vector<10x10x8xf32> to vector<8x8x8xf32>
    %110 = vector.shape_cast %109 : vector<8x8x8xf32> to vector<64x8xf32>
    %111 = vector.extract_strided_slice %104 {offsets = [1, 0, 0], sizes = [8, 8, 8], strides = [1, 1, 1]} : vector<10x10x8xf32> to vector<8x8x8xf32>
    %112 = vector.shape_cast %111 : vector<8x8x8xf32> to vector<64x8xf32>
    %113 = vector.extract_strided_slice %104 {offsets = [1, 1, 0], sizes = [8, 8, 8], strides = [1, 1, 1]} : vector<10x10x8xf32> to vector<8x8x8xf32>
    %114 = vector.shape_cast %113 : vector<8x8x8xf32> to vector<64x8xf32>
    %115 = vector.extract_strided_slice %104 {offsets = [1, 2, 0], sizes = [8, 8, 8], strides = [1, 1, 1]} : vector<10x10x8xf32> to vector<8x8x8xf32>
    %116 = vector.shape_cast %115 : vector<8x8x8xf32> to vector<64x8xf32>
    %117 = vector.extract_strided_slice %104 {offsets = [2, 0, 0], sizes = [8, 8, 8], strides = [1, 1, 1]} : vector<10x10x8xf32> to vector<8x8x8xf32>
    %118 = vector.shape_cast %117 : vector<8x8x8xf32> to vector<64x8xf32>
    %119 = vector.extract_strided_slice %104 {offsets = [2, 1, 0], sizes = [8, 8, 8], strides = [1, 1, 1]} : vector<10x10x8xf32> to vector<8x8x8xf32>
    %120 = vector.shape_cast %119 : vector<8x8x8xf32> to vector<64x8xf32>
    %121 = vector.extract_strided_slice %104 {offsets = [2, 2, 0], sizes = [8, 8, 8], strides = [1, 1, 1]} : vector<10x10x8xf32> to vector<8x8x8xf32>
    %122 = vector.shape_cast %121 : vector<8x8x8xf32> to vector<64x8xf32>
    %123 = tpu.concatenate %106, %108, %110, %112, %114, %116, %118, %120, %122 in 1 : vector<64x8xf32>, vector<64x8xf32>, vector<64x8xf32>, vector<64x8xf32>, vector<64x8xf32>, vector<64x8xf32>, vector<64x8xf32>, vector<64x8xf32>, vector<64x8xf32> -> vector<64x72xf32>
    %124 = tpu.concatenate %123, %2 in 1 : vector<64x72xf32>, vector<64x12xf32> -> vector<64x84xf32>
    %c0_44 = arith.constant 0 : index
    %c0_45 = arith.constant 0 : index
    %125 = vector.load %arg12[%c0_44, %c0_45] : memref<84x8xf32, #tpu.memory_space<vmem>>, vector<84x8xf32>
    %cst_46 = arith.constant dense<0.000000e+00> : vector<64x8xf32>
    %126 = tpu.matmul %124, %125, %cst_46 {dimension_numbers = #tpu.dot_dimension_numbers<[1], [0], [0], [1], [0, 0, 1, 1], [], []>} : vector<64x84xf32>, vector<84x8xf32>, vector<64x8xf32> -> vector<64x8xf32>
    %c0_47 = arith.constant 0 : index
    %c0_48 = arith.constant 0 : index
    %127 = vector.load %arg13[%c0_47, %c0_48] : memref<1x8xf32, #tpu.memory_space<vmem>>, vector<1x8xf32>
    %128 = vector.broadcast %127 : vector<1x8xf32> to vector<64x8xf32>
    %129 = arith.addf %126, %128 : vector<64x8xf32>
    %c0_49 = arith.constant 0 : index
    %c0_50 = arith.constant 0 : index
    %130 = vector.load %arg14[%c0_49, %c0_50] : memref<8x8xf32, #tpu.memory_space<vmem>>, vector<8x8xf32>
    %cst_51 = arith.constant dense<0.000000e+00> : vector<64x8xf32>
    %131 = tpu.matmul %129, %130, %cst_51 {dimension_numbers = #tpu.dot_dimension_numbers<[1], [0], [0], [1], [0, 0, 1, 1], [], []>} : vector<64x8xf32>, vector<8x8xf32>, vector<64x8xf32> -> vector<64x8xf32>
    %c0_52 = arith.constant 0 : index
    %c0_53 = arith.constant 0 : index
    %132 = vector.load %arg15[%c0_52, %c0_53] : memref<1x8xf32, #tpu.memory_space<vmem>>, vector<1x8xf32>
    %133 = vector.broadcast %132 : vector<1x8xf32> to vector<64x8xf32>
    %134 = arith.addf %131, %133 : vector<64x8xf32>
    %cst_54 = arith.constant dense<0.000000e+00> : vector<8xf32>
    %135 = vector.multi_reduction <add>, %134, %cst_54 [0] : vector<64x8xf32> to vector<8xf32>
    %136 = vector.shape_cast %135 : vector<8xf32> to vector<1x8xf32>
    %c0_55 = arith.constant 0 : index
    %c0_56 = arith.constant 0 : index
    %137 = vector.load %arg16[%c0_55, %c0_56] : memref<8x8xf32, #tpu.memory_space<vmem>>, vector<8x8xf32>
    %cst_57 = arith.constant dense<0.000000e+00> : vector<1x8xf32>
    %138 = tpu.matmul %136, %137, %cst_57 {dimension_numbers = #tpu.dot_dimension_numbers<[1], [0], [0], [1], [0, 0, 1, 1], [], []>} : vector<1x8xf32>, vector<8x8xf32>, vector<1x8xf32> -> vector<1x8xf32>
    %c0_58 = arith.constant 0 : index
    %c0_59 = arith.constant 0 : index
    %139 = vector.load %arg17[%c0_58, %c0_59] : memref<1x8xf32, #tpu.memory_space<vmem>>, vector<1x8xf32>
    %140 = arith.addf %138, %139 : vector<1x8xf32>
    %141 = vector.broadcast %140 : vector<1x8xf32> to vector<64x8xf32>
    %142 = arith.addf %129, %141 : vector<64x8xf32>
    %143 = tpu.transpose %142, [1, 0] : vector<64x8xf32> -> vector<8x64xf32>
    %c0_60 = arith.constant 0 : index
    %c0_61 = arith.constant 0 : index
    %c0_62 = arith.constant 0 : index
    %144 = vector.load %arg18[%c0_60, %c0_61, %c0_62] : memref<1x8x64xf32, #tpu.memory_space<vmem>>, vector<1x8x64xf32>
    %145 = vector.shape_cast %144 : vector<1x8x64xf32> to vector<8x64xf32>
    %146 = vector.shape_cast %143 : vector<8x64xf32> to vector<1x8x64xf32>
    tpu.vector_store %arg18[%c0_60, %c0_61, %c0_62], %146 {strides = array<i32>} : memref<1x8x64xf32, #tpu.memory_space<vmem>>, vector<1x8x64xf32>,
    return
  }
  func.func @transform_0(%arg0: i32) -> (i32, i32, i32) {
    %c0_i32 = arith.constant 0 : i32
    %c0_i32_0 = arith.constant 0 : i32
    %c0_i32_1 = arith.constant 0 : i32
    return %arg0, %c0_i32, %c0_i32_0 : i32, i32, i32
  }
  func.func @transform_1(%arg0: i32) -> (i32, i32, i32) {
    %c0_i32 = arith.constant 0 : i32
    %c0_i32_0 = arith.constant 0 : i32
    %c0_i32_1 = arith.constant 0 : i32
    return %arg0, %c0_i32, %c0_i32_0 : i32, i32, i32
  }
  func.func @transform_2(%arg0: i32) -> (i32, i32) {
    %c0_i32 = arith.constant 0 : i32
    %c0_i32_0 = arith.constant 0 : i32
    %c0_i32_1 = arith.constant 0 : i32
    return %c0_i32, %c0_i32_0 : i32, i32
  }
  func.func @transform_3(%arg0: i32) -> (i32, i32) {
    %c0_i32 = arith.constant 0 : i32
    %c0_i32_0 = arith.constant 0 : i32
    %c0_i32_1 = arith.constant 0 : i32
    return %c0_i32, %c0_i32_0 : i32, i32
  }
  func.func @transform_4(%arg0: i32) -> (i32, i32) {
    %c0_i32 = arith.constant 0 : i32
    %c0_i32_0 = arith.constant 0 : i32
    %c0_i32_1 = arith.constant 0 : i32
    return %c0_i32, %c0_i32_0 : i32, i32
  }
  func.func @transform_5(%arg0: i32) -> (i32, i32) {
    %c0_i32 = arith.constant 0 : i32
    %c0_i32_0 = arith.constant 0 : i32
    %c0_i32_1 = arith.constant 0 : i32
    return %c0_i32, %c0_i32_0 : i32, i32
  }
  func.func @transform_6(%arg0: i32) -> (i32, i32) {
    %c0_i32 = arith.constant 0 : i32
    %c0_i32_0 = arith.constant 0 : i32
    %c0_i32_1 = arith.constant 0 : i32
    return %c0_i32, %c0_i32_0 : i32, i32
  }
  func.func @transform_7(%arg0: i32) -> (i32, i32) {
    %c0_i32 = arith.constant 0 : i32
    %c0_i32_0 = arith.constant 0 : i32
    %c0_i32_1 = arith.constant 0 : i32
    return %c0_i32, %c0_i32_0 : i32, i32
  }
  func.func @transform_8(%arg0: i32) -> (i32, i32) {
    %c0_i32 = arith.constant 0 : i32
    %c0_i32_0 = arith.constant 0 : i32
    %c0_i32_1 = arith.constant 0 : i32
    return %c0_i32, %c0_i32_0 : i32, i32
  }
  func.func @transform_9(%arg0: i32) -> (i32, i32) {
    %c0_i32 = arith.constant 0 : i32
    %c0_i32_0 = arith.constant 0 : i32
    %c0_i32_1 = arith.constant 0 : i32
    return %c0_i32, %c0_i32_0 : i32, i32
  }
  func.func @transform_10(%arg0: i32) -> (i32, i32) {
    %c0_i32 = arith.constant 0 : i32
    %c0_i32_0 = arith.constant 0 : i32
    %c0_i32_1 = arith.constant 0 : i32
    return %c0_i32, %c0_i32_0 : i32, i32
  }
  func.func @transform_11(%arg0: i32) -> (i32, i32) {
    %c0_i32 = arith.constant 0 : i32
    %c0_i32_0 = arith.constant 0 : i32
    %c0_i32_1 = arith.constant 0 : i32
    return %c0_i32, %c0_i32_0 : i32, i32
  }
  func.func @transform_12(%arg0: i32) -> (i32, i32) {
    %c0_i32 = arith.constant 0 : i32
    %c0_i32_0 = arith.constant 0 : i32
    %c0_i32_1 = arith.constant 0 : i32
    return %c0_i32, %c0_i32_0 : i32, i32
  }
  func.func @transform_13(%arg0: i32) -> (i32, i32) {
    %c0_i32 = arith.constant 0 : i32
    %c0_i32_0 = arith.constant 0 : i32
    %c0_i32_1 = arith.constant 0 : i32
    return %c0_i32, %c0_i32_0 : i32, i32
  }
  func.func @transform_14(%arg0: i32) -> (i32, i32) {
    %c0_i32 = arith.constant 0 : i32
    %c0_i32_0 = arith.constant 0 : i32
    %c0_i32_1 = arith.constant 0 : i32
    return %c0_i32, %c0_i32_0 : i32, i32
  }
  func.func @transform_15(%arg0: i32) -> (i32, i32) {
    %c0_i32 = arith.constant 0 : i32
    %c0_i32_0 = arith.constant 0 : i32
    %c0_i32_1 = arith.constant 0 : i32
    return %c0_i32, %c0_i32_0 : i32, i32
  }
  func.func @transform_16(%arg0: i32) -> (i32, i32) {
    %c0_i32 = arith.constant 0 : i32
    %c0_i32_0 = arith.constant 0 : i32
    %c0_i32_1 = arith.constant 0 : i32
    return %c0_i32, %c0_i32_0 : i32, i32
  }
  func.func @transform_17(%arg0: i32) -> (i32, i32, i32) {
    %c0_i32 = arith.constant 0 : i32
    %c0_i32_0 = arith.constant 0 : i32
    %c0_i32_1 = arith.constant 0 : i32
    return %arg0, %c0_i32, %c0_i32_0 : i32, i32, i32
  }
}

</mosaic_0001>

<llo_original>
// kernel: tpu_custom_call.1
$region0: #{tpu_custom_call.1}
  #allocation0 [shape = 'u32[]', space=smem, size = 0x4, offset = 0x4, fixed_abs, tag = 'smem constant byte address 0x4 - core index']
  #allocation1 [shape = 'u32[72,128]{1,0:T(1,128)}', space=vmem, size = 0x9000, scoped, tag = 'internal scratch']
  %s0 = inlined_call_operand.vmem [shape: f32[2,12,64], index: 0, kind: input, shape index: {}]
  %s1 = inlined_call_operand.vmem [shape: f32[2,1,16], index: 1, kind: input, shape index: {}]
  %s2 = inlined_call_operand.vmem [shape: f32[1,12], index: 2, kind: input, shape index: {}]
  %s3 = inlined_call_operand.vmem [shape: f32[1,12], index: 3, kind: input, shape index: {}]
  %s4 = inlined_call_operand.vmem [shape: f32[12,12], index: 4, kind: input, shape index: {}]
  %s5 = inlined_call_operand.vmem [shape: f32[108,8], index: 5, kind: input, shape index: {}]
  %s6 = inlined_call_operand.vmem [shape: f32[1,8], index: 6, kind: input, shape index: {}]
  %s7 = inlined_call_operand.vmem [shape: f32[16,8], index: 7, kind: input, shape index: {}]
  %s8 = inlined_call_operand.vmem [shape: f32[1,8], index: 8, kind: input, shape index: {}]
  %s9 = inlined_call_operand.vmem [shape: f32[1,8], index: 9, kind: input, shape index: {}]
  %s10 = inlined_call_operand.vmem [shape: f32[8,8], index: 10, kind: input, shape index: {}]
  %s11 = inlined_call_operand.vmem [shape: f32[84,8], index: 11, kind: input, shape index: {}]
  %s12 = inlined_call_operand.vmem [shape: f32[1,8], index: 12, kind: input, shape index: {}]
  %s13 = inlined_call_operand.vmem [shape: f32[8,8], index: 13, kind: input, shape index: {}]
  %s14 = inlined_call_operand.vmem [shape: f32[1,8], index: 14, kind: input, shape index: {}]
  %s15 = inlined_call_operand.vmem [shape: f32[8,8], index: 15, kind: input, shape index: {}]
  %s16 = inlined_call_operand.vmem [shape: f32[1,8], index: 16, kind: input, shape index: {}]
  %s17 = inlined_call_operand.hbm [shape: f32[2,8,64], index: 17, kind: output, shape index: {}]
  %s18 = sld [smem:[#allocation0]]
  $region101: #{tpu_custom_call.1} parent=0
    _
  %s20 = ssub.s32 1, %s18
  %s21 = scalar_select 0, %s20, %s18
  $region1: #{tpu_custom_call.1} parent=0
    #allocation2 [shape = 'u8[8192]{0}', space=vmem, size = 0x2000, scoped, tag = 'output window, operand 0']
    #allocation3 [shape = 's32[2]{0}', space=sflag, size = 0x8, scoped, tag = 'scoped memory for tpu_custom_call.1']
    %22 = vsyncpa [#allocation3], 0
    %s23 = scalar_lea.sflag [#allocation3], 1
    %24 = vsyncpa %s23, 0
    loop: start=0, step=1, limit=4
    $region2: #{tpu_custom_call.1} parent=1 // loop_pre_header
      _
    $region3: #{tpu_custom_call.1} parent=1 // loop_header
      %s26 = sphi 0, %s30
      %p27 = scmp.ge.s32.totalorder %s26, 4
      %s36 = sphi 0, %s38
      %s39 = sphi 0, %s36
      %s40 = sphi 0, %s39
      %s56 = sphi 0, %s40
      %s62 = sphi 0, %s64
      %s65 = sphi 0, %s62
      %s66 = sphi 0, %s65
      %s82 = sphi 0, %s66
      %s86 = sphi 0, %s86
      %s88 = sphi 0, %s86
      %s89 = sphi 0, %s88
      %s103 = sphi 0, %s89
      %s107 = sphi 0, %s107
      %s109 = sphi 0, %s107
      %s110 = sphi 0, %s109
      %s124 = sphi 0, %s110
      %s128 = sphi 0, %s128
      %s130 = sphi 0, %s128
      %s131 = sphi 0, %s130
      %s145 = sphi 0, %s131
      %s149 = sphi 0, %s149
      %s151 = sphi 0, %s149
      %s152 = sphi 0, %s151
      %s166 = sphi 0, %s152
      %s170 = sphi 0, %s170
      %s172 = sphi 0, %s170
      %s173 = sphi 0, %s172
      %s187 = sphi 0, %s173
      %s191 = sphi 0, %s191
      %s193 = sphi 0, %s191
      %s194 = sphi 0, %s193
      %s208 = sphi 0, %s194
      %s212 = sphi 0, %s212
      %s214 = sphi 0, %s212
      %s215 = sphi 0, %s214
      %s229 = sphi 0, %s215
      %s233 = sphi 0, %s233
      %s235 = sphi 0, %s233
      %s236 = sphi 0, %s235
      %s250 = sphi 0, %s236
      %s254 = sphi 0, %s254
      %s256 = sphi 0, %s254
      %s257 = sphi 0, %s256
      %s271 = sphi 0, %s257
      %s275 = sphi 0, %s275
      %s277 = sphi 0, %s275
      %s278 = sphi 0, %s277
      %s292 = sphi 0, %s278
      %s296 = sphi 0, %s296
      %s298 = sphi 0, %s296
      %s299 = sphi 0, %s298
      %s313 = sphi 0, %s299
      %s317 = sphi 0, %s317
      %s319 = sphi 0, %s317
      %s320 = sphi 0, %s319
      %s334 = sphi 0, %s320
      %s338 = sphi 0, %s338
      %s340 = sphi 0, %s338
      %s341 = sphi 0, %s340
      %s355 = sphi 0, %s341
      %s359 = sphi 0, %s359
      %s361 = sphi 0, %s359
      %s362 = sphi 0, %s361
      %s376 = sphi 0, %s362
      %s380 = sphi 0, %s380
      %s382 = sphi 0, %s380
      %s383 = sphi 0, %s382
      %s397 = sphi 0, %s383
      %s403 = sphi 0, %s405
      %s406 = sphi 0, %s403
      %s407 = sphi 0, %s406
      %s423 = sphi 0, %s407
    $region4: #{tpu_custom_call.1} parent=1 // loop_header_branch
      %29 = sbr.rel (%p27) target = $region8
    $region5: #{tpu_custom_call.1} parent=1 // loop_body
      %s31 = ssub.s32 %s26, 1
      %s32 = ssub.s32 %s26, 2
      %s33 = sadd.s32 %s26, 1
      %s34 = ssub.s32 %s26, %s33
      %p35 = scmp.eq.s32.totalorder %s34, 0
      %s37 = sadd.s32 %s36, 1
      %s38 = scalar_select %p35, %s36, %s37
      %p41 = pneg %p35
      %p42 = scmp.eq.s32.totalorder %s26, 1
      %p43 = por %p41, %p42
      %p44 = scmp.ne.s32.totalorder %s36, %s39
      %p45 = scmp.eq.s32.totalorder %s26, 0
      %p46 = por %p44, %p45
      %p47 = scmp.ne.s32.totalorder %s36, %s39
      %p48 = scmp.eq.s32.totalorder %s31, 1
      %p49 = por %p47, %p48
      %p50 = scmp.ne.s32.totalorder %s39, %s40
      %p51 = scmp.eq.s32.totalorder %s31, 0
      %p52 = por %p50, %p51
      %p53 = scmp.ne.s32.totalorder %s39, %s40
      %p54 = scmp.eq.s32.totalorder %s32, 1
      %p55 = por %p53, %p54
      %p57 = scmp.ne.s32.totalorder %s40, %s56
      %p58 = scmp.eq.s32.totalorder %s32, 0
      %p59 = por %p57, %p58
      %s60 = ssub.s32 %s26, %s33
      %p61 = scmp.eq.s32.totalorder %s60, 0
      %s63 = sadd.s32 %s62, 1
      %s64 = scalar_select %p61, %s62, %s63
      %p67 = pneg %p61
      %p68 = scmp.eq.s32.totalorder %s26, 1
      %p69 = por %p67, %p68
      %p70 = scmp.ne.s32.totalorder %s62, %s65
      %p71 = scmp.eq.s32.totalorder %s26, 0
      %p72 = por %p70, %p71
      %p73 = scmp.ne.s32.totalorder %s62, %s65
      %p74 = scmp.eq.s32.totalorder %s31, 1
      %p75 = por %p73, %p74
      %p76 = scmp.ne.s32.totalorder %s65, %s66
      %p77 = scmp.eq.s32.totalorder %s31, 0
      %p78 = por %p76, %p77
      %p79 = scmp.ne.s32.totalorder %s65, %s66
      %p80 = scmp.eq.s32.totalorder %s32, 1
      %p81 = por %p79, %p80
      %p83 = scmp.ne.s32.totalorder %s66, %s82
      %p84 = scmp.eq.s32.totalorder %s32, 0
      %p85 = por %p83, %p84
      %s87 = sadd.s32 %s86, 1
      %p90 = scmp.eq.s32.totalorder %s26, 1
      %p91 = scmp.ne.s32.totalorder %s86, %s88
      %p92 = scmp.eq.s32.totalorder %s26, 0
      %p93 = por %p91, %p92
      %p94 = scmp.ne.s32.totalorder %s86, %s88
      %p95 = scmp.eq.s32.totalorder %s31, 1
      %p96 = por %p94, %p95
      %p97 = scmp.ne.s32.totalorder %s88, %s89
      %p98 = scmp.eq.s32.totalorder %s31, 0
      %p99 = por %p97, %p98
      %p100 = scmp.ne.s32.totalorder %s88, %s89
      %p101 = scmp.eq.s32.totalorder %s32, 1
      %p102 = por %p100, %p101
      %p104 = scmp.ne.s32.totalorder %s89, %s103
      %p105 = scmp.eq.s32.totalorder %s32, 0
      %p106 = por %p104, %p105
      %s108 = sadd.s32 %s107, 1
      %p111 = scmp.eq.s32.totalorder %s26, 1
      %p112 = scmp.ne.s32.totalorder %s107, %s109
      %p113 = scmp.eq.s32.totalorder %s26, 0
      %p114 = por %p112, %p113
      %p115 = scmp.ne.s32.totalorder %s107, %s109
      %p116 = scmp.eq.s32.totalorder %s31, 1
      %p117 = por %p115, %p116
      %p118 = scmp.ne.s32.totalorder %s109, %s110
      %p119 = scmp.eq.s32.totalorder %s31, 0
      %p120 = por %p118, %p119
      %p121 = scmp.ne.s32.totalorder %s109, %s110
      %p122 = scmp.eq.s32.totalorder %s32, 1
      %p123 = por %p121, %p122
      %p125 = scmp.ne.s32.totalorder %s110, %s124
      %p126 = scmp.eq.s32.totalorder %s32, 0
      %p127 = por %p125, %p126
      %s129 = sadd.s32 %s128, 1
      %p132 = scmp.eq.s32.totalorder %s26, 1
      %p133 = scmp.ne.s32.totalorder %s128, %s130
      %p134 = scmp.eq.s32.totalorder %s26, 0
      %p135 = por %p133, %p134
      %p136 = scmp.ne.s32.totalorder %s128, %s130
      %p137 = scmp.eq.s32.totalorder %s31, 1
      %p138 = por %p136, %p137
      %p139 = scmp.ne.s32.totalorder %s130, %s131
      %p140 = scmp.eq.s32.totalorder %s31, 0
      %p141 = por %p139, %p140
      %p142 = scmp.ne.s32.totalorder %s130, %s131
      %p143 = scmp.eq.s32.totalorder %s32, 1
      %p144 = por %p142, %p143
      %p146 = scmp.ne.s32.totalorder %s131, %s145
      %p147 = scmp.eq.s32.totalorder %s32, 0
      %p148 = por %p146, %p147
      %s150 = sadd.s32 %s149, 1
      %p153 = scmp.eq.s32.totalorder %s26, 1
      %p154 = scmp.ne.s32.totalorder %s149, %s151
      %p155 = scmp.eq.s32.totalorder %s26, 0
      %p156 = por %p154, %p155
      %p157 = scmp.ne.s32.totalorder %s149, %s151
      %p158 = scmp.eq.s32.totalorder %s31, 1
      %p159 = por %p157, %p158
      %p160 = scmp.ne.s32.totalorder %s151, %s152
      %p161 = scmp.eq.s32.totalorder %s31, 0
      %p162 = por %p160, %p161
      %p163 = scmp.ne.s32.totalorder %s151, %s152
      %p164 = scmp.eq.s32.totalorder %s32, 1
      %p165 = por %p163, %p164
      %p167 = scmp.ne.s32.totalorder %s152, %s166
      %p168 = scmp.eq.s32.totalorder %s32, 0
      %p169 = por %p167, %p168
      %s171 = sadd.s32 %s170, 1
      %p174 = scmp.eq.s32.totalorder %s26, 1
      %p175 = scmp.ne.s32.totalorder %s170, %s172
      %p176 = scmp.eq.s32.totalorder %s26, 0
      %p177 = por %p175, %p176
      %p178 = scmp.ne.s32.totalorder %s170, %s172
      %p179 = scmp.eq.s32.totalorder %s31, 1
      %p180 = por %p178, %p179
      %p181 = scmp.ne.s32.totalorder %s172, %s173
      %p182 = scmp.eq.s32.totalorder %s31, 0
      %p183 = por %p181, %p182
      %p184 = scmp.ne.s32.totalorder %s172, %s173
      %p185 = scmp.eq.s32.totalorder %s32, 1
      %p186 = por %p184, %p185
      %p188 = scmp.ne.s32.totalorder %s173, %s187
      %p189 = scmp.eq.s32.totalorder %s32, 0
      %p190 = por %p188, %p189
      %s192 = sadd.s32 %s191, 1
      %p195 = scmp.eq.s32.totalorder %s26, 1
      %p196 = scmp.ne.s32.totalorder %s191, %s193
      %p197 = scmp.eq.s32.totalorder %s26, 0
      %p198 = por %p196, %p197
      %p199 = scmp.ne.s32.totalorder %s191, %s193
      %p200 = scmp.eq.s32.totalorder %s31, 1
      %p201 = por %p199, %p200
      %p202 = scmp.ne.s32.totalorder %s193, %s194
      %p203 = scmp.eq.s32.totalorder %s31, 0
      %p204 = por %p202, %p203
      %p205 = scmp.ne.s32.totalorder %s193, %s194
      %p206 = scmp.eq.s32.totalorder %s32, 1
      %p207 = por %p205, %p206
      %p209 = scmp.ne.s32.totalorder %s194, %s208
      %p210 = scmp.eq.s32.totalorder %s32, 0
      %p211 = por %p209, %p210
      %s213 = sadd.s32 %s212, 1
      %p216 = scmp.eq.s32.totalorder %s26, 1
      %p217 = scmp.ne.s32.totalorder %s212, %s214
      %p218 = scmp.eq.s32.totalorder %s26, 0
      %p219 = por %p217, %p218
      %p220 = scmp.ne.s32.totalorder %s212, %s214
      %p221 = scmp.eq.s32.totalorder %s31, 1
      %p222 = por %p220, %p221
      %p223 = scmp.ne.s32.totalorder %s214, %s215
      %p224 = scmp.eq.s32.totalorder %s31, 0
      %p225 = por %p223, %p224
      %p226 = scmp.ne.s32.totalorder %s214, %s215
      %p227 = scmp.eq.s32.totalorder %s32, 1
      %p228 = por %p226, %p227
      %p230 = scmp.ne.s32.totalorder %s215, %s229
      %p231 = scmp.eq.s32.totalorder %s32, 0
      %p232 = por %p230, %p231
      %s234 = sadd.s32 %s233, 1
      %p237 = scmp.eq.s32.totalorder %s26, 1
      %p238 = scmp.ne.s32.totalorder %s233, %s235
      %p239 = scmp.eq.s32.totalorder %s26, 0
      %p240 = por %p238, %p239
      %p241 = scmp.ne.s32.totalorder %s233, %s235
      %p242 = scmp.eq.s32.totalorder %s31, 1
      %p243 = por %p241, %p242
      %p244 = scmp.ne.s32.totalorder %s235, %s236
      %p245 = scmp.eq.s32.totalorder %s31, 0
      %p246 = por %p244, %p245
      %p247 = scmp.ne.s32.totalorder %s235, %s236
      %p248 = scmp.eq.s32.totalorder %s32, 1
      %p249 = por %p247, %p248
      %p251 = scmp.ne.s32.totalorder %s236, %s250
      %p252 = scmp.eq.s32.totalorder %s32, 0
      %p253 = por %p251, %p252
      %s255 = sadd.s32 %s254, 1
      %p258 = scmp.eq.s32.totalorder %s26, 1
      %p259 = scmp.ne.s32.totalorder %s254, %s256
      %p260 = scmp.eq.s32.totalorder %s26, 0
      %p261 = por %p259, %p260
      %p262 = scmp.ne.s32.totalorder %s254, %s256
      %p263 = scmp.eq.s32.totalorder %s31, 1
      %p264 = por %p262, %p263
      %p265 = scmp.ne.s32.totalorder %s256, %s257
      %p266 = scmp.eq.s32.totalorder %s31, 0
      %p267 = por %p265, %p266
      %p268 = scmp.ne.s32.totalorder %s256, %s257
      %p269 = scmp.eq.s32.totalorder %s32, 1
      %p270 = por %p268, %p269
      %p272 = scmp.ne.s32.totalorder %s257, %s271
      %p273 = scmp.eq.s32.totalorder %s32, 0
      %p274 = por %p272, %p273
      %s276 = sadd.s32 %s275, 1
      %p279 = scmp.eq.s32.totalorder %s26, 1
      %p280 = scmp.ne.s32.totalorder %s275, %s277
      %p281 = scmp.eq.s32.totalorder %s26, 0
      %p282 = por %p280, %p281
      %p283 = scmp.ne.s32.totalorder %s275, %s277
      %p284 = scmp.eq.s32.totalorder %s31, 1
      %p285 = por %p283, %p284
      %p286 = scmp.ne.s32.totalorder %s277, %s278
      %p287 = scmp.eq.s32.totalorder %s31, 0
      %p288 = por %p286, %p287
      %p289 = scmp.ne.s32.totalorder %s277, %s278
      %p290 = scmp.eq.s32.totalorder %s32, 1
      %p291 = por %p289, %p290
      %p293 = scmp.ne.s32.totalorder %s278, %s292
      %p294 = scmp.eq.s32.totalorder %s32, 0
      %p295 = por %p293, %p294
      %s297 = sadd.s32 %s296, 1
      %p300 = scmp.eq.s32.totalorder %s26, 1
      %p301 = scmp.ne.s32.totalorder %s296, %s298
      %p302 = scmp.eq.s32.totalorder %s26, 0
      %p303 = por %p301, %p302
      %p304 = scmp.ne.s32.totalorder %s296, %s298
      %p305 = scmp.eq.s32.totalorder %s31, 1
      %p306 = por %p304, %p305
      %p307 = scmp.ne.s32.totalorder %s298, %s299
      %p308 = scmp.eq.s32.totalorder %s31, 0
      %p309 = por %p307, %p308
      %p310 = scmp.ne.s32.totalorder %s298, %s299
      %p311 = scmp.eq.s32.totalorder %s32, 1
      %p312 = por %p310, %p311
      %p314 = scmp.ne.s32.totalorder %s299, %s313
      %p315 = scmp.eq.s32.totalorder %s32, 0
      %p316 = por %p314, %p315
      %s318 = sadd.s32 %s317, 1
      %p321 = scmp.eq.s32.totalorder %s26, 1
      %p322 = scmp.ne.s32.totalorder %s317, %s319
      %p323 = scmp.eq.s32.totalorder %s26, 0
      %p324 = por %p322, %p323
      %p325 = scmp.ne.s32.totalorder %s317, %s319
      %p326 = scmp.eq.s32.totalorder %s31, 1
      %p327 = por %p325, %p326
      %p328 = scmp.ne.s32.totalorder %s319, %s320
      %p329 = scmp.eq.s32.totalorder %s31, 0
      %p330 = por %p328, %p329
      %p331 = scmp.ne.s32.totalorder %s319, %s320
      %p332 = scmp.eq.s32.totalorder %s32, 1
      %p333 = por %p331, %p332
      %p335 = scmp.ne.s32.totalorder %s320, %s334
      %p336 = scmp.eq.s32.totalorder %s32, 0
      %p337 = por %p335, %p336
      %s339 = sadd.s32 %s338, 1
      %p342 = scmp.eq.s32.totalorder %s26, 1
      %p343 = scmp.ne.s32.totalorder %s338, %s340
      %p344 = scmp.eq.s32.totalorder %s26, 0
      %p345 = por %p343, %p344
      %p346 = scmp.ne.s32.totalorder %s338, %s340
      %p347 = scmp.eq.s32.totalorder %s31, 1
      %p348 = por %p346, %p347
      %p349 = scmp.ne.s32.totalorder %s340, %s341
      %p350 = scmp.eq.s32.totalorder %s31, 0
      %p351 = por %p349, %p350
      %p352 = scmp.ne.s32.totalorder %s340, %s341
      %p353 = scmp.eq.s32.totalorder %s32, 1
      %p354 = por %p352, %p353
      %p356 = scmp.ne.s32.totalorder %s341, %s355
      %p357 = scmp.eq.s32.totalorder %s32, 0
      %p358 = por %p356, %p357
      %s360 = sadd.s32 %s359, 1
      %p363 = scmp.eq.s32.totalorder %s26, 1
      %p364 = scmp.ne.s32.totalorder %s359, %s361
      %p365 = scmp.eq.s32.totalorder %s26, 0
      %p366 = por %p364, %p365
      %p367 = scmp.ne.s32.totalorder %s359, %s361
      %p368 = scmp.eq.s32.totalorder %s31, 1
      %p369 = por %p367, %p368
      %p370 = scmp.ne.s32.totalorder %s361, %s362
      %p371 = scmp.eq.s32.totalorder %s31, 0
      %p372 = por %p370, %p371
      %p373 = scmp.ne.s32.totalorder %s361, %s362
      %p374 = scmp.eq.s32.totalorder %s32, 1
      %p375 = por %p373, %p374
      %p377 = scmp.ne.s32.totalorder %s362, %s376
      %p378 = scmp.eq.s32.totalorder %s32, 0
      %p379 = por %p377, %p378
      %s381 = sadd.s32 %s380, 1
      %p384 = scmp.eq.s32.totalorder %s26, 1
      %p385 = scmp.ne.s32.totalorder %s380, %s382
      %p386 = scmp.eq.s32.totalorder %s26, 0
      %p387 = por %p385, %p386
      %p388 = scmp.ne.s32.totalorder %s380, %s382
      %p389 = scmp.eq.s32.totalorder %s31, 1
      %p390 = por %p388, %p389
      %p391 = scmp.ne.s32.totalorder %s382, %s383
      %p392 = scmp.eq.s32.totalorder %s31, 0
      %p393 = por %p391, %p392
      %p394 = scmp.ne.s32.totalorder %s382, %s383
      %p395 = scmp.eq.s32.totalorder %s32, 1
      %p396 = por %p394, %p395
      %p398 = scmp.ne.s32.totalorder %s383, %s397
      %p399 = scmp.eq.s32.totalorder %s32, 0
      %p400 = por %p398, %p399
      %s401 = ssub.s32 %s26, %s33
      %p402 = scmp.eq.s32.totalorder %s401, 0
      %s404 = sadd.s32 %s403, 1
      %s405 = scalar_select %p402, %s403, %s404
      %p408 = pneg %p402
      %p409 = scmp.eq.s32.totalorder %s26, 1
      %p410 = por %p408, %p409
      %p411 = scmp.ne.s32.totalorder %s403, %s406
      %p412 = scmp.eq.s32.totalorder %s26, 0
      %p413 = por %p411, %p412
      %p414 = scmp.ne.s32.totalorder %s403, %s406
      %p415 = scmp.eq.s32.totalorder %s31, 1
      %p416 = por %p414, %p415
      %p417 = scmp.ne.s32.totalorder %s406, %s407
      %p418 = scmp.eq.s32.totalorder %s31, 0
      %p419 = por %p417, %p418
      %p420 = scmp.ne.s32.totalorder %s406, %s407
      %p421 = scmp.eq.s32.totalorder %s32, 1
      %p422 = por %p420, %p421
      %p424 = scmp.ne.s32.totalorder %s407, %s423
      %p425 = scmp.eq.s32.totalorder %s32, 0
      %p426 = por %p424, %p425
      %p427 = scmp.le.s32.totalorder 1, %s26
      %p428 = scmp.lt.s32.totalorder %s26, 3
      %p429 = pnand %p427, %p428
      %p430 = pneg %p429
      // Predicated region
      $region9: #{tpu_custom_call.1} parent=5 // pred_check
        _
      $region10: #{tpu_custom_call.1} parent=5 // pred_check_branch
        %432 = sbr.rel (%p429) target = $region12
      $region11: #{tpu_custom_call.1} parent=5 // pred_region
        %s433 = ssub.s32 %s26, 1
        // Predicated region
        $region13: #{tpu_custom_call.1} parent=11 // pred_check
          %p434 = pneg %p99
        $region14: #{tpu_custom_call.1} parent=11 // pred_check_branch
          %436 = sbr.rel (%p434) target = $region16
        $region15: #{tpu_custom_call.1} parent=11 // pred_region
          _
        $region16: #{tpu_custom_call.1} parent=11 // pred_fallthru
          _
        // Predicated region
        $region17: #{tpu_custom_call.1} parent=11 // pred_check
          %p437 = pneg %p120
        $region18: #{tpu_custom_call.1} parent=11 // pred_check_branch
          %439 = sbr.rel (%p437) target = $region20
        $region19: #{tpu_custom_call.1} parent=11 // pred_region
          _
        $region20: #{tpu_custom_call.1} parent=11 // pred_fallthru
          _
        // Predicated region
        $region21: #{tpu_custom_call.1} parent=11 // pred_check
          %p440 = pneg %p141
        $region22: #{tpu_custom_call.1} parent=11 // pred_check_branch
          %442 = sbr.rel (%p440) target = $region24
        $region23: #{tpu_custom_call.1} parent=11 // pred_region
          _
        $region24: #{tpu_custom_call.1} parent=11 // pred_fallthru
          _
        // Predicated region
        $region25: #{tpu_custom_call.1} parent=11 // pred_check
          %p443 = pneg %p162
        $region26: #{tpu_custom_call.1} parent=11 // pred_check_branch
          %445 = sbr.rel (%p443) target = $region28
        $region27: #{tpu_custom_call.1} parent=11 // pred_region
          _
        $region28: #{tpu_custom_call.1} parent=11 // pred_fallthru
          _
        // Predicated region
        $region29: #{tpu_custom_call.1} parent=11 // pred_check
          %p446 = pneg %p183
        $region30: #{tpu_custom_call.1} parent=11 // pred_check_branch
          %448 = sbr.rel (%p446) target = $region32
        $region31: #{tpu_custom_call.1} parent=11 // pred_region
          _
        $region32: #{tpu_custom_call.1} parent=11 // pred_fallthru
          _
        // Predicated region
        $region33: #{tpu_custom_call.1} parent=11 // pred_check
          %p449 = pneg %p204
        $region34: #{tpu_custom_call.1} parent=11 // pred_check_branch
          %451 = sbr.rel (%p449) target = $region36
        $region35: #{tpu_custom_call.1} parent=11 // pred_region
          _
        $region36: #{tpu_custom_call.1} parent=11 // pred_fallthru
          _
        // Predicated region
        $region37: #{tpu_custom_call.1} parent=11 // pred_check
          %p452 = pneg %p225
        $region38: #{tpu_custom_call.1} parent=11 // pred_check_branch
          %454 = sbr.rel (%p452) target = $region40
        $region39: #{tpu_custom_call.1} parent=11 // pred_region
          _
        $region40: #{tpu_custom_call.1} parent=11 // pred_fallthru
          _
        // Predicated region
        $region41: #{tpu_custom_call.1} parent=11 // pred_check
          %p455 = pneg %p246
        $region42: #{tpu_custom_call.1} parent=11 // pred_check_branch
          %457 = sbr.rel (%p455) target = $region44
        $region43: #{tpu_custom_call.1} parent=11 // pred_region
          _
        $region44: #{tpu_custom_call.1} parent=11 // pred_fallthru
          _
        // Predicated region
        $region45: #{tpu_custom_call.1} parent=11 // pred_check
          %p458 = pneg %p267
        $region46: #{tpu_custom_call.1} parent=11 // pred_check_branch
          %460 = sbr.rel (%p458) target = $region48
        $region47: #{tpu_custom_call.1} parent=11 // pred_region
          _
        $region48: #{tpu_custom_call.1} parent=11 // pred_fallthru
          _
        // Predicated region
        $region49: #{tpu_custom_call.1} parent=11 // pred_check
          %p461 = pneg %p288
        $region50: #{tpu_custom_call.1} parent=11 // pred_check_branch
          %463 = sbr.rel (%p461) target = $region52
        $region51: #{tpu_custom_call.1} parent=11 // pred_region
          _
        $region52: #{tpu_custom_call.1} parent=11 // pred_fallthru
          _
        // Predicated region
        $region53: #{tpu_custom_call.1} parent=11 // pred_check
          %p464 = pneg %p309
        $region54: #{tpu_custom_call.1} parent=11 // pred_check_branch
          %466 = sbr.rel (%p464) target = $region56
        $region55: #{tpu_custom_call.1} parent=11 // pred_region
          _
        $region56: #{tpu_custom_call.1} parent=11 // pred_fallthru
          _
        // Predicated region
        $region57: #{tpu_custom_call.1} parent=11 // pred_check
          %p467 = pneg %p330
        $region58: #{tpu_custom_call.1} parent=11 // pred_check_branch
          %469 = sbr.rel (%p467) target = $region60
        $region59: #{tpu_custom_call.1} parent=11 // pred_region
          _
        $region60: #{tpu_custom_call.1} parent=11 // pred_fallthru
          _
        // Predicated region
        $region61: #{tpu_custom_call.1} parent=11 // pred_check
          %p470 = pneg %p351
        $region62: #{tpu_custom_call.1} parent=11 // pred_check_branch
          %472 = sbr.rel (%p470) target = $region64
        $region63: #{tpu_custom_call.1} parent=11 // pred_region
          _
        $region64: #{tpu_custom_call.1} parent=11 // pred_fallthru
          _
        // Predicated region
        $region65: #{tpu_custom_call.1} parent=11 // pred_check
          %p473 = pneg %p372
        $region66: #{tpu_custom_call.1} parent=11 // pred_check_branch
          %475 = sbr.rel (%p473) target = $region68
        $region67: #{tpu_custom_call.1} parent=11 // pred_region
          _
        $region68: #{tpu_custom_call.1} parent=11 // pred_fallthru
          _
        // Predicated region
        $region69: #{tpu_custom_call.1} parent=11 // pred_check
          %p476 = pneg %p393
        $region70: #{tpu_custom_call.1} parent=11 // pred_check_branch
          %478 = sbr.rel (%p476) target = $region72
        $region71: #{tpu_custom_call.1} parent=11 // pred_region
          _
        $region72: #{tpu_custom_call.1} parent=11 // pred_fallthru
          _
      $region12: #{tpu_custom_call.1} parent=5 // pred_fallthru
        _
      %p479 = scmp.lt.s32.totalorder %s26, 2
      // Predicated region
      $region73: #{tpu_custom_call.1} parent=5 // pred_check
        %p480 = pneg %p479
      $region74: #{tpu_custom_call.1} parent=5 // pred_check_branch
        %482 = sbr.rel (%p480) target = $region76
      $region75: #{tpu_custom_call.1} parent=5 // pred_region
        // Predicated region
        $region77: #{tpu_custom_call.1} parent=75 // pred_check
          %p483 = pneg %p46
        $region78: #{tpu_custom_call.1} parent=75 // pred_check_branch
          %485 = sbr.rel (%p483) target = $region80
        $region79: #{tpu_custom_call.1} parent=75 // pred_region
          %p486 = scmp.lt.s32.totalorder %s26, 1
          %s487 = scalar_select %p486, %s26, 1
          %s488 = smul.addr %s487, 2
          %s489 = smul.addr %s488, 8
          %s490 = scalar_lea.vmem %s0, %s489
        $region80: #{tpu_custom_call.1} parent=75 // pred_fallthru
          _
        // Predicated region
        $region81: #{tpu_custom_call.1} parent=75 // pred_check
          %p491 = pneg %p72
        $region82: #{tpu_custom_call.1} parent=75 // pred_check_branch
          %493 = sbr.rel (%p491) target = $region84
        $region83: #{tpu_custom_call.1} parent=75 // pred_region
          %p494 = scmp.lt.s32.totalorder %s26, 1
          %s495 = scalar_select %p494, %s26, 1
          %s496 = scalar_lea.vmem %s1, %s495
        $region84: #{tpu_custom_call.1} parent=75 // pred_fallthru
          _
      $region76: #{tpu_custom_call.1} parent=5 // pred_fallthru
        _
      %p497 = scmp.le.s32.totalorder 1, %s26
      %p498 = scmp.lt.s32.totalorder %s26, 3
      %p499 = pnand %p497, %p498
      %p500 = pneg %p499
      // Predicated region
      $region85: #{tpu_custom_call.1} parent=5 // pred_check
        _
      $region86: #{tpu_custom_call.1} parent=5 // pred_check_branch
        %502 = sbr.rel (%p499) target = $region88
      $region87: #{tpu_custom_call.1} parent=5 // pred_region
        %s503 = ssub.s32 %s26, 1
        %p504 = scmp.lt.s32.totalorder %s31, 1
        %s505 = scalar_select %p504, %s31, 1
        %s506 = smul.addr %s505, 2
        %s507 = smul.addr %s506, 8
        %s508 = scalar_lea.vmem %s0, %s507
        %p509 = pneg %p52
        %p510 = pneg %p49
        %p511 = scmp.lt.s32.totalorder %s31, 1
        %s512 = scalar_select %p511, %s31, 1
        %s513 = scalar_lea.vmem %s1, %s512
        %p514 = pneg %p78
        %p515 = pneg %p75
        %p516 = pneg %p99
        %p517 = pneg %p96
        %p518 = pneg %p120
        %p519 = pneg %p117
        %p520 = pneg %p141
        %p521 = pneg %p138
        %p522 = pneg %p162
        %p523 = pneg %p159
        %p524 = pneg %p183
        %p525 = pneg %p180
        %p526 = pneg %p204
        %p527 = pneg %p201
        %p528 = pneg %p225
        %p529 = pneg %p222
        %p530 = pneg %p246
        %p531 = pneg %p243
        %p532 = pneg %p267
        %p533 = pneg %p264
        %p534 = pneg %p288
        %p535 = pneg %p285
        %p536 = pneg %p309
        %p537 = pneg %p306
        %p538 = pneg %p330
        %p539 = pneg %p327
        %p540 = pneg %p351
        %p541 = pneg %p348
        %p542 = pneg %p372
        %p543 = pneg %p369
        %p544 = pneg %p393
        %p545 = pneg %p390
        %p546 = pneg %p419
        %p547 = pneg %p416
        %s548 = sand.u32 %s406, 1
        %s549 = scalar_lea.sflag [#allocation3], %s548
        %s550 = sand.u32 %s406, 1
        %s551 = smul.addr %s550, 8
        %s552 = scalar_lea.vmem [#allocation2], %s551
        %p553 = scmp.lt.s32.totalorder %s31, 1
        %s554 = scalar_select %p553, %s31, 1
        %s555 = smul.addr %s554, 2
        %s556 = smul.addr %s555, 8
        %s557 = scalar_lea.vmem %s0, %s556
        %p558 = scmp.lt.s32.totalorder %s31, 1
        %s559 = scalar_select %p558, %s31, 1
        %s560 = scalar_lea.vmem %s1, %s559
        %v561 = vld [vmem:[%s557] sm:$0xff]
        %v562 = vld [vmem:[%s557 + $0x8] sm:$0xf]
        %563 = vxpose.xlu0.b32.start [1/16] %v561, 128
        %564 = vxpose.xlu0.b32.cont [2/16] %v562, 128
        %565 = vxpose.xlu0.b32.cont [3/16] 0.0, 128
        %566 = vxpose.xlu0.b32.cont [4/16] 0.0, 128
        %567 = vxpose.xlu0.b32.cont [5/16] 0.0, 128
        %568 = vxpose.xlu0.b32.cont [6/16] 0.0, 128
        %569 = vxpose.xlu0.b32.cont [7/16] 0.0, 128
        %570 = vxpose.xlu0.b32.cont [8/16] 0.0, 128
        %571 = vxpose.xlu0.b32.cont [9/16] 0.0, 128
        %572 = vxpose.xlu0.b32.cont [10/16] 0.0, 128
        %573 = vxpose.xlu0.b32.cont [11/16] 0.0, 128
        %574 = vxpose.xlu0.b32.cont [12/16] 0.0, 128
        %575 = vxpose.xlu0.b32.cont [13/16] 0.0, 128
        %576 = vxpose.xlu0.b32.cont [14/16] 0.0, 128
        %577 = vxpose.xlu0.b32.cont [15/16] 0.0, 128
        %578 = vxpose.xlu0.b32.end [16/16] 0.0, 128
        %v579 = vpop.trf.xlu0
        %v580 = vpop.trf.xlu0
        %v581 = vpop.trf.xlu0
        %v582 = vpop.trf.xlu0
        %v583 = vpop.trf.xlu0
        %v584 = vpop.trf.xlu0
        %v585 = vpop.trf.xlu0
        %v586 = vpop.trf.xlu0
        %v587 = vpop.trf.xlu0
        %v588 = vpop.trf.xlu0
        %v589 = vpop.trf.xlu0
        %v590 = vpop.trf.xlu0
        %v591 = vpop.trf.xlu0
        %v592 = vpop.trf.xlu0
        %v593 = vpop.trf.xlu0
        %v594 = vpop.trf.xlu0
        %v595 = vld [vmem:[%s560] sm:$0x1]
        %v596 = vld [vmem:[%s2] sm:$0x1]
        %v597 = vld [vmem:[%s3] sm:$0x1]
        %v598 = vld [vmem:[%s4] sm:$0xff]
        %v599 = vld [vmem:[%s4 + $0x8] sm:$0xf]
        %vm600 = vcmask 97280
        %v601 = vsel %vm600, %v579, 0.0
        %v602 = vsel %vm600, %v580, 0.0
        %v603 = vadd.f32 %v601, %v602
        %v604 = vsel %vm600, %v581, 0.0
        %v605 = vadd.f32 %v603, %v604
        %v606 = vsel %vm600, %v582, 0.0
        %v607 = vadd.f32 %v605, %v606
        %v608 = vsel %vm600, %v583, 0.0
        %v609 = vadd.f32 %v607, %v608
        %v610 = vsel %vm600, %v584, 0.0
        %v611 = vadd.f32 %v609, %v610
        %v612 = vsel %vm600, %v585, 0.0
        %v613 = vadd.f32 %v611, %v612
        %v614 = vsel %vm600, %v586, 0.0
        %v615 = vadd.f32 %v613, %v614
        %v616 = vrot.slane %v615, 4
        %v617 = vadd.f32 %v615, %v616
        %v618 = vrot.slane %v617, 2
        %v619 = vadd.f32 %v617, %v618
        %v620 = vrot.slane %v619, 1
        %v621 = vadd.f32 %v619, %v620
        %v622 = vrcp.pop 64.0
        %v623 = vmul.f32 64.0, %v622
        %v624 = vsub.f32 1.0, %v623
        %v625 = vmul.f32 %v622, %v624
        %v626 = vadd.f32 %v622, %v625
        %vm627 = vweird.f32 %v622
        %v628 = vsel %vm627, %v622, %v626
        %v629 = vmul.f32 %v621, %v628
        %v631 = vsel %vm600, %v629, 0
        %vm633 = vcmask 1043456
        %v635 = vsel %vm633, %v599, 0
        %637 = vmatpush.msra.mxu0 0.0
        %638 = vmatpush.msra.mxu0 0.0
        %639 = vmatpush.msra.mxu0 0.0
        %640 = vmatpush.msra.mxu0 0.0
        %641 = vmatpush.msra.mxu0 0.0
        %642 = vmatpush.msra.mxu0 0.0
        %643 = vmatpush.msra.mxu0 0.0
        %644 = vmatpush.msra.mxu0 0.0
        %645 = vmatpush.msra.mxu0 0.0
        %646 = vmatpush.msra.mxu0 0.0
        %647 = vmatpush.msra.mxu0 0.0
        %648 = vmatpush.msra.mxu0 0.0
        %649 = vmatpush.msra.mxu0 0.0
        %650 = vmatpush.msra.mxu0 0.0
        %651 = vmatpush.msra.mxu0 %v635
        %652 = vmatpush.msra.mxu0 %v598
        %653 = vmatmul.f32.gmra.mxu0 %v631
        %v654 = vpop.f32.mrf.mxu0
        %v655 = vadd.f32 0.0, %v654
        %656 = vdwg.mxu0
        %v657 = vperm.slane %v655, 0
        %v658 = vsub.f32 %v579, %v657
        %v659 = vsub.f32 %v580, %v657
        %v660 = vsub.f32 %v581, %v657
        %v661 = vsub.f32 %v582, %v657
        %v662 = vsub.f32 %v583, %v657
        %v663 = vsub.f32 %v584, %v657
        %v664 = vsub.f32 %v585, %v657
        %v665 = vsub.f32 %v586, %v657
        %v666 = vmul.f32 %v658, %v658
        %v667 = vmul.f32 %v659, %v659
        %v668 = vmul.f32 %v660, %v660
        %v669 = vmul.f32 %v661, %v661
        %v670 = vmul.f32 %v662, %v662
        %v671 = vmul.f32 %v663, %v663
        %v672 = vmul.f32 %v664, %v664
        %v673 = vmul.f32 %v665, %v665
        %v674 = vsel %vm600, %v666, 0.0
        %v675 = vsel %vm600, %v667, 0.0
        %v676 = vadd.f32 %v674, %v675
        %v677 = vsel %vm600, %v668, 0.0
        %v678 = vadd.f32 %v676, %v677
        %v679 = vsel %vm600, %v669, 0.0
        %v680 = vadd.f32 %v678, %v679
        %v681 = vsel %vm600, %v670, 0.0
        %v682 = vadd.f32 %v680, %v681
        %v683 = vsel %vm600, %v671, 0.0
        %v684 = vadd.f32 %v682, %v683
        %v685 = vsel %vm600, %v672, 0.0
        %v686 = vadd.f32 %v684, %v685
        %v687 = vsel %vm600, %v673, 0.0
        %v688 = vadd.f32 %v686, %v687
        %v689 = vrot.slane %v688, 4
        %v690 = vadd.f32 %v688, %v689
        %v691 = vrot.slane %v690, 2
        %v692 = vadd.f32 %v690, %v691
        %v693 = vrot.slane %v692, 1
        %v694 = vadd.f32 %v692, %v693
        %v695 = vmul.f32 %v694, %v628
        %v697 = vsel %vm600, %v695, 0
        %699 = vmatpush.msra.mxu0 0.0
        %700 = vmatpush.msra.mxu0 0.0
        %701 = vmatpush.msra.mxu0 0.0
        %702 = vmatpush.msra.mxu0 0.0
        %703 = vmatpush.msra.mxu0 0.0
        %704 = vmatpush.msra.mxu0 0.0
        %705 = vmatpush.msra.mxu0 0.0
        %706 = vmatpush.msra.mxu0 0.0
        %707 = vmatpush.msra.mxu0 0.0
        %708 = vmatpush.msra.mxu0 0.0
        %709 = vmatpush.msra.mxu0 0.0
        %710 = vmatpush.msra.mxu0 0.0
        %711 = vmatpush.msra.mxu0 0.0
        %712 = vmatpush.msra.mxu0 0.0
        %713 = vmatpush.msra.mxu0 %v635
        %714 = vmatpush.msra.mxu0 %v598
        %715 = vmatmul.f32.gmra.mxu0 %v697
        %v716 = vpop.f32.mrf.mxu0
        %v717 = vadd.f32 1e-05, %v716
        %718 = vdwg.mxu0
        %v719 = vrsqrt.pop %v717
        %v720 = vmul.f32 %v719, %v717
        %v721 = vmul.f32 %v720, %v719
        %v722 = vmul.f32 0.5, %v721
        %v723 = vsub.f32 1.5, %v722
        %v724 = vmul.f32 %v719, %v723
        %vm725 = vweird.f32 %v717
        %vm726 = vweird.f32 %v719
        %vm727 = vmor %vm725, %vm726
        %v728 = vsel %vm727, %v719, %v724
        %v729 = vperm.slane %v728, 0
        %v730 = vmul.f32 %v658, %v729
        %v731 = vmul.f32 %v659, %v729
        %v732 = vmul.f32 %v660, %v729
        %v733 = vmul.f32 %v661, %v729
        %v734 = vmul.f32 %v662, %v729
        %v735 = vmul.f32 %v663, %v729
        %v736 = vmul.f32 %v664, %v729
        %v737 = vmul.f32 %v665, %v729
        %v739 = vperm.slane %v596, 0
        %v741 = vmul.f32 %v730, %v739
        %v742 = vmul.f32 %v731, %v739
        %v743 = vmul.f32 %v732, %v739
        %v744 = vmul.f32 %v733, %v739
        %v745 = vmul.f32 %v734, %v739
        %v746 = vmul.f32 %v735, %v739
        %v747 = vmul.f32 %v736, %v739
        %v748 = vmul.f32 %v737, %v739
        %v750 = vperm.slane %v597, 0
        %v752 = vadd.f32 %v741, %v750
        %v753 = vadd.f32 %v742, %v750
        %v754 = vadd.f32 %v743, %v750
        %v755 = vadd.f32 %v744, %v750
        %v756 = vadd.f32 %v745, %v750
        %v757 = vadd.f32 %v746, %v750
        %v758 = vadd.f32 %v747, %v750
        %v759 = vadd.f32 %v748, %v750
        %v760 = vxor.u32 %v752, 2147483648
        %v761 = vxor.u32 %v753, 2147483648
        %v762 = vxor.u32 %v754, 2147483648
        %v763 = vxor.u32 %v755, 2147483648
        %v764 = vxor.u32 %v756, 2147483648
        %v765 = vxor.u32 %v757, 2147483648
        %v766 = vxor.u32 %v758, 2147483648
        %v767 = vxor.u32 %v759, 2147483648
        %v768 = vmul.f32 %v760, 1.442695
        %v769 = vpow.pop %v768
        %v770 = vmul.f32 %v761, 1.442695
        %v771 = vpow.pop %v770
        %v772 = vmul.f32 %v762, 1.442695
        %v773 = vpow.pop %v772
        %v774 = vmul.f32 %v763, 1.442695
        %v775 = vpow.pop %v774
        %v776 = vmul.f32 %v764, 1.442695
        %v777 = vpow.pop %v776
        %v778 = vmul.f32 %v765, 1.442695
        %v779 = vpow.pop %v778
        %v780 = vmul.f32 %v766, 1.442695
        %v781 = vpow.pop %v780
        %v782 = vmul.f32 %v767, 1.442695
        %v783 = vpow.pop %v782
        %v784 = vadd.f32 %v769, 1.0
        %v785 = vadd.f32 %v771, 1.0
        %v786 = vadd.f32 %v773, 1.0
        %v787 = vadd.f32 %v775, 1.0
        %v788 = vadd.f32 %v777, 1.0
        %v789 = vadd.f32 %v779, 1.0
        %v790 = vadd.f32 %v781, 1.0
        %v791 = vadd.f32 %v783, 1.0
        %v792 = vrcp.pop %v784
        %v793 = vmul.f32 %v784, %v792
        %v794 = vsub.f32 1.0, %v793
        %v795 = vmul.f32 %v792, %v794
        %v796 = vadd.f32 %v792, %v795
        %vm797 = vweird.f32 %v784
        %vm798 = vweird.f32 %v792
        %vm799 = vmor %vm797, %vm798
        %v800 = vsel %vm799, %v792, %v796
        %v801 = vand.u32 2147483647, %v784
        %vm802 = vcmp.eq.f32.partialorder %v801, 8.507059e+37
        %v803 = vand.u32 %v784, 2147483648
        %v804 = vor.u32 1.1754944e-38, %v803
        %v805 = vsel %vm802, %v804, %v800
        %v806 = vmul.f32 1.0, %v805
        %v807 = vrcp.pop %v785
        %v808 = vmul.f32 %v785, %v807
        %v809 = vsub.f32 1.0, %v808
        %v810 = vmul.f32 %v807, %v809
        %v811 = vadd.f32 %v807, %v810
        %vm812 = vweird.f32 %v785
        %vm813 = vweird.f32 %v807
        %vm814 = vmor %vm812, %vm813
        %v815 = vsel %vm814, %v807, %v811
        %v816 = vand.u32 2147483647, %v785
        %vm817 = vcmp.eq.f32.partialorder %v816, 8.507059e+37
        %v818 = vand.u32 %v785, 2147483648
        %v819 = vor.u32 1.1754944e-38, %v818
        %v820 = vsel %vm817, %v819, %v815
        %v821 = vmul.f32 1.0, %v820
        %v822 = vrcp.pop %v786
        %v823 = vmul.f32 %v786, %v822
        %v824 = vsub.f32 1.0, %v823
        %v825 = vmul.f32 %v822, %v824
        %v826 = vadd.f32 %v822, %v825
        %vm827 = vweird.f32 %v786
        %vm828 = vweird.f32 %v822
        %vm829 = vmor %vm827, %vm828
        %v830 = vsel %vm829, %v822, %v826
        %v831 = vand.u32 2147483647, %v786
        %vm832 = vcmp.eq.f32.partialorder %v831, 8.507059e+37
        %v833 = vand.u32 %v786, 2147483648
        %v834 = vor.u32 1.1754944e-38, %v833
        %v835 = vsel %vm832, %v834, %v830
        %v836 = vmul.f32 1.0, %v835
        %v837 = vrcp.pop %v787
        %v838 = vmul.f32 %v787, %v837
        %v839 = vsub.f32 1.0, %v838
        %v840 = vmul.f32 %v837, %v839
        %v841 = vadd.f32 %v837, %v840
        %vm842 = vweird.f32 %v787
        %vm843 = vweird.f32 %v837
        %vm844 = vmor %vm842, %vm843
        %v845 = vsel %vm844, %v837, %v841
        %v846 = vand.u32 2147483647, %v787
        %vm847 = vcmp.eq.f32.partialorder %v846, 8.507059e+37
        %v848 = vand.u32 %v787, 2147483648
        %v849 = vor.u32 1.1754944e-38, %v848
        %v850 = vsel %vm847, %v849, %v845
        %v851 = vmul.f32 1.0, %v850
        %v852 = vrcp.pop %v788
        %v853 = vmul.f32 %v788, %v852
        %v854 = vsub.f32 1.0, %v853
        %v855 = vmul.f32 %v852, %v854
        %v856 = vadd.f32 %v852, %v855
        %vm857 = vweird.f32 %v788
        %vm858 = vweird.f32 %v852
        %vm859 = vmor %vm857, %vm858
        %v860 = vsel %vm859, %v852, %v856
        %v861 = vand.u32 2147483647, %v788
        %vm862 = vcmp.eq.f32.partialorder %v861, 8.507059e+37
        %v863 = vand.u32 %v788, 2147483648
        %v864 = vor.u32 1.1754944e-38, %v863
        %v865 = vsel %vm862, %v864, %v860
        %v866 = vmul.f32 1.0, %v865
        %v867 = vrcp.pop %v789
        %v868 = vmul.f32 %v789, %v867
        %v869 = vsub.f32 1.0, %v868
        %v870 = vmul.f32 %v867, %v869
        %v871 = vadd.f32 %v867, %v870
        %vm872 = vweird.f32 %v789
        %vm873 = vweird.f32 %v867
        %vm874 = vmor %vm872, %vm873
        %v875 = vsel %vm874, %v867, %v871
        %v876 = vand.u32 2147483647, %v789
        %vm877 = vcmp.eq.f32.partialorder %v876, 8.507059e+37
        %v878 = vand.u32 %v789, 2147483648
        %v879 = vor.u32 1.1754944e-38, %v878
        %v880 = vsel %vm877, %v879, %v875
        %v881 = vmul.f32 1.0, %v880
        %v882 = vrcp.pop %v790
        %v883 = vmul.f32 %v790, %v882
        %v884 = vsub.f32 1.0, %v883
        %v885 = vmul.f32 %v882, %v884
        %v886 = vadd.f32 %v882, %v885
        %vm887 = vweird.f32 %v790
        %vm888 = vweird.f32 %v882
        %vm889 = vmor %vm887, %vm888
        %v890 = vsel %vm889, %v882, %v886
        %v891 = vand.u32 2147483647, %v790
        %vm892 = vcmp.eq.f32.partialorder %v891, 8.507059e+37
        %v893 = vand.u32 %v790, 2147483648
        %v894 = vor.u32 1.1754944e-38, %v893
        %v895 = vsel %vm892, %v894, %v890
        %v896 = vmul.f32 1.0, %v895
        %v897 = vrcp.pop %v791
        %v898 = vmul.f32 %v791, %v897
        %v899 = vsub.f32 1.0, %v898
        %v900 = vmul.f32 %v897, %v899
        %v901 = vadd.f32 %v897, %v900
        %vm902 = vweird.f32 %v791
        %vm903 = vweird.f32 %v897
        %vm904 = vmor %vm902, %vm903
        %v905 = vsel %vm904, %v897, %v901
        %v906 = vand.u32 2147483647, %v791
        %vm907 = vcmp.eq.f32.partialorder %v906, 8.507059e+37
        %v908 = vand.u32 %v791, 2147483648
        %v909 = vor.u32 1.1754944e-38, %v908
        %v910 = vsel %vm907, %v909, %v905
        %v911 = vmul.f32 1.0, %v910
        %v912 = vmul.f32 %v752, %v806
        %v913 = vmul.f32 %v753, %v821
        %v914 = vmul.f32 %v754, %v836
        %v915 = vmul.f32 %v755, %v851
        %v916 = vmul.f32 %v756, %v866
        %v917 = vmul.f32 %v757, %v881
        %v918 = vmul.f32 %v758, %v896
        %v919 = vmul.f32 %v759, %v911
        %v920 = vld [vmem:[%s7] sm:$0xff]
        %v921 = vld [vmem:[%s7 + $0x8] sm:$0xff]
        %vm922 = vcmask 130048
        %v924 = vsel %vm922, %v595, 0
        %926 = vmatpush.msra.mxu0 0.0
        %927 = vmatpush.msra.mxu0 0.0
        %928 = vmatpush.msra.mxu0 0.0
        %929 = vmatpush.msra.mxu0 0.0
        %930 = vmatpush.msra.mxu0 0.0
        %931 = vmatpush.msra.mxu0 0.0
        %932 = vmatpush.msra.mxu0 0.0
        %933 = vmatpush.msra.mxu0 0.0
        %934 = vmatpush.msra.mxu0 0.0
        %935 = vmatpush.msra.mxu0 0.0
        %936 = vmatpush.msra.mxu0 0.0
        %937 = vmatpush.msra.mxu0 0.0
        %938 = vmatpush.msra.mxu0 0.0
        %939 = vmatpush.msra.mxu0 0.0
        %940 = vmatpush.msra.mxu0 %v921
        %941 = vmatpush.msra.mxu0 %v920
        %942 = vmatmul.f32.gmra.mxu0 %v924
        %v943 = vpop.f32.mrf.mxu0
        %v944 = vadd.f32 0.0, %v943
        %945 = vdwg.mxu0
        %v955 = vrot.slane 0.0, 7
        %v956 = vrot.slane %v912, 7
        %v957 = vrot.slane %v913, 7
        %v958 = vrot.slane %v914, 7
        %v959 = vrot.slane %v915, 7
        %v960 = vrot.slane %v916, 7
        %v961 = vrot.slane %v917, 7
        %v962 = vrot.slane %v918, 7
        %v963 = vrot.slane %v919, 7
        %vm973 = vcmask 1040384
        %v974 = vsel %vm973, 0.0, %v955
        %v975 = vsel %vm973, 0.0, %v956
        %v976 = vsel %vm973, 0.0, %v957
        %v977 = vsel %vm973, 0.0, %v958
        %v978 = vsel %vm973, 0.0, %v959
        %v979 = vsel %vm973, 0.0, %v960
        %v980 = vsel %vm973, 0.0, %v961
        %v981 = vsel %vm973, 0.0, %v962
        %v982 = vsel %vm973, 0.0, %v963
        %v983 = vsel %vm973, %v955, 0.0
        %v984 = vsel %vm973, %v956, 0.0
        %v985 = vsel %vm973, %v957, 0.0
        %v986 = vsel %vm973, %v958, 0.0
        %v987 = vsel %vm973, %v959, 0.0
        %v988 = vsel %vm973, %v960, 0.0
        %v989 = vsel %vm973, %v961, 0.0
        %v990 = vsel %vm973, %v962, 0.0
        %v991 = vsel %vm973, %v963, 0.0
        %vm1008 = vcmask 1046528
        %v1009 = vrot.slane %v974, 1
        %v1010 = vrot.slane %v983, 1
        %v1011 = vsel %vm1008, %v1009, %v1010
        %v1012 = vrot.slane %v975, 1
        %v1013 = vrot.slane %v984, 1
        %v1014 = vsel %vm1008, %v1012, %v1013
        %v1015 = vrot.slane %v976, 1
        %v1016 = vrot.slane %v985, 1
        %v1017 = vsel %vm1008, %v1015, %v1016
        %v1018 = vrot.slane %v977, 1
        %v1019 = vrot.slane %v986, 1
        %v1020 = vsel %vm1008, %v1018, %v1019
        %v1021 = vrot.slane %v978, 1
        %v1022 = vrot.slane %v987, 1
        %v1023 = vsel %vm1008, %v1021, %v1022
        %v1024 = vrot.slane %v979, 1
        %v1025 = vrot.slane %v988, 1
        %v1026 = vsel %vm1008, %v1024, %v1025
        %v1027 = vrot.slane %v980, 1
        %v1028 = vrot.slane %v989, 1
        %v1029 = vsel %vm1008, %v1027, %v1028
        %v1030 = vrot.slane %v981, 1
        %v1031 = vrot.slane %v990, 1
        %v1032 = vsel %vm1008, %v1030, %v1031
        %vm1033 = vcmask 1045504
        %v1034 = vrot.slane %v974, 2
        %v1035 = vrot.slane %v983, 2
        %v1036 = vsel %vm1033, %v1034, %v1035
        %v1037 = vrot.slane %v975, 2
        %v1038 = vrot.slane %v984, 2
        %v1039 = vsel %vm1033, %v1037, %v1038
        %v1040 = vrot.slane %v976, 2
        %v1041 = vrot.slane %v985, 2
        %v1042 = vsel %vm1033, %v1040, %v1041
        %v1043 = vrot.slane %v977, 2
        %v1044 = vrot.slane %v986, 2
        %v1045 = vsel %vm1033, %v1043, %v1044
        %v1046 = vrot.slane %v978, 2
        %v1047 = vrot.slane %v987, 2
        %v1048 = vsel %vm1033, %v1046, %v1047
        %v1049 = vrot.slane %v979, 2
        %v1050 = vrot.slane %v988, 2
        %v1051 = vsel %vm1033, %v1049, %v1050
        %v1052 = vrot.slane %v980, 2
        %v1053 = vrot.slane %v989, 2
        %v1054 = vsel %vm1033, %v1052, %v1053
        %v1055 = vrot.slane %v981, 2
        %v1056 = vrot.slane %v990, 2
        %v1057 = vsel %vm1033, %v1055, %v1056
        %v1060 = vrot.slane %v982, 1
        %v1061 = vrot.slane %v991, 1
        %v1062 = vsel %vm1008, %v1060, %v1061
        %v1063 = vrot.slane %v982, 2
        %v1064 = vrot.slane %v991, 2
        %v1065 = vsel %vm1033, %v1063, %v1064
        %1066 = vrot.lane.b32.xlu0 %v1011, 12
        %v1067 = vpop.permute.xlu0 %1066
        %1068 = vrot.lane.b32.xlu0 %v1014, 12
        %v1069 = vpop.permute.xlu0 %1068
        %1070 = vrot.lane.b32.xlu0 %v1017, 12
        %v1071 = vpop.permute.xlu0 %1070
        %1072 = vrot.lane.b32.xlu0 %v1020, 12
        %v1073 = vpop.permute.xlu0 %1072
        %1074 = vrot.lane.b32.xlu0 %v1023, 12
        %v1075 = vpop.permute.xlu0 %1074
        %1076 = vrot.lane.b32.xlu0 %v1026, 12
        %v1077 = vpop.permute.xlu0 %1076
        %1078 = vrot.lane.b32.xlu0 %v1029, 12
        %v1079 = vpop.permute.xlu0 %1078
        %1080 = vrot.lane.b32.xlu0 %v1032, 12
        %v1081 = vpop.permute.xlu0 %1080
        %1090 = vrot.lane.b32.xlu0 %v1036, 24
        %v1091 = vpop.permute.xlu0 %1090
        %1092 = vrot.lane.b32.xlu0 %v1039, 24
        %v1093 = vpop.permute.xlu0 %1092
        %1094 = vrot.lane.b32.xlu0 %v1042, 24
        %v1095 = vpop.permute.xlu0 %1094
        %1096 = vrot.lane.b32.xlu0 %v1045, 24
        %v1097 = vpop.permute.xlu0 %1096
        %1098 = vrot.lane.b32.xlu0 %v1048, 24
        %v1099 = vpop.permute.xlu0 %1098
        %1100 = vrot.lane.b32.xlu0 %v1051, 24
        %v1101 = vpop.permute.xlu0 %1100
        %1102 = vrot.lane.b32.xlu0 %v1054, 24
        %v1103 = vpop.permute.xlu0 %1102
        %1104 = vrot.lane.b32.xlu0 %v1057, 24
        %v1105 = vpop.permute.xlu0 %1104
        %1114 = vrot.lane.b32.xlu0 %v975, 36
        %v1115 = vpop.permute.xlu0 %1114
        %1116 = vrot.lane.b32.xlu0 %v976, 36
        %v1117 = vpop.permute.xlu0 %1116
        %1118 = vrot.lane.b32.xlu0 %v977, 36
        %v1119 = vpop.permute.xlu0 %1118
        %1120 = vrot.lane.b32.xlu0 %v978, 36
        %v1121 = vpop.permute.xlu0 %1120
        %1122 = vrot.lane.b32.xlu0 %v979, 36
        %v1123 = vpop.permute.xlu0 %1122
        %1124 = vrot.lane.b32.xlu0 %v980, 36
        %v1125 = vpop.permute.xlu0 %1124
        %1126 = vrot.lane.b32.xlu0 %v981, 36
        %v1127 = vpop.permute.xlu0 %1126
        %1128 = vrot.lane.b32.xlu0 %v982, 36
        %v1129 = vpop.permute.xlu0 %1128
        %1138 = vrot.lane.b32.xlu0 %v1014, 48
        %v1139 = vpop.permute.xlu0 %1138
        %1140 = vrot.lane.b32.xlu0 %v1017, 48
        %v1141 = vpop.permute.xlu0 %1140
        %1142 = vrot.lane.b32.xlu0 %v1020, 48
        %v1143 = vpop.permute.xlu0 %1142
        %1144 = vrot.lane.b32.xlu0 %v1023, 48
        %v1145 = vpop.permute.xlu0 %1144
        %1146 = vrot.lane.b32.xlu0 %v1026, 48
        %v1147 = vpop.permute.xlu0 %1146
        %1148 = vrot.lane.b32.xlu0 %v1029, 48
        %v1149 = vpop.permute.xlu0 %1148
        %1150 = vrot.lane.b32.xlu0 %v1032, 48
        %v1151 = vpop.permute.xlu0 %1150
        %1152 = vrot.lane.b32.xlu0 %v1062, 48
        %v1153 = vpop.permute.xlu0 %1152
        %1162 = vrot.lane.b32.xlu0 %v1039, 60
        %v1163 = vpop.permute.xlu0 %1162
        %1164 = vrot.lane.b32.xlu0 %v1042, 60
        %v1165 = vpop.permute.xlu0 %1164
        %1166 = vrot.lane.b32.xlu0 %v1045, 60
        %v1167 = vpop.permute.xlu0 %1166
        %1168 = vrot.lane.b32.xlu0 %v1048, 60
        %v1169 = vpop.permute.xlu0 %1168
        %1170 = vrot.lane.b32.xlu0 %v1051, 60
        %v1171 = vpop.permute.xlu0 %1170
        %1172 = vrot.lane.b32.xlu0 %v1054, 60
        %v1173 = vpop.permute.xlu0 %1172
        %1174 = vrot.lane.b32.xlu0 %v1057, 60
        %v1175 = vpop.permute.xlu0 %1174
        %1176 = vrot.lane.b32.xlu0 %v1065, 60
        %v1177 = vpop.permute.xlu0 %1176
        %1186 = vrot.lane.b32.xlu0 %v976, 72
        %v1187 = vpop.permute.xlu0 %1186
        %1188 = vrot.lane.b32.xlu0 %v977, 72
        %v1189 = vpop.permute.xlu0 %1188
        %1190 = vrot.lane.b32.xlu0 %v978, 72
        %v1191 = vpop.permute.xlu0 %1190
        %1192 = vrot.lane.b32.xlu0 %v979, 72
        %v1193 = vpop.permute.xlu0 %1192
        %1194 = vrot.lane.b32.xlu0 %v980, 72
        %v1195 = vpop.permute.xlu0 %1194
        %1196 = vrot.lane.b32.xlu0 %v981, 72
        %v1197 = vpop.permute.xlu0 %1196
        %1198 = vrot.lane.b32.xlu0 %v982, 72
        %v1199 = vpop.permute.xlu0 %1198
        %1200 = vrot.lane.b32.xlu0 %v974, 72
        %v1201 = vpop.permute.xlu0 %1200
        %1210 = vrot.lane.b32.xlu0 %v1017, 84
        %v1211 = vpop.permute.xlu0 %1210
        %1212 = vrot.lane.b32.xlu0 %v1020, 84
        %v1213 = vpop.permute.xlu0 %1212
        %1214 = vrot.lane.b32.xlu0 %v1023, 84
        %v1215 = vpop.permute.xlu0 %1214
        %1216 = vrot.lane.b32.xlu0 %v1026, 84
        %v1217 = vpop.permute.xlu0 %1216
        %1218 = vrot.lane.b32.xlu0 %v1029, 84
        %v1219 = vpop.permute.xlu0 %1218
        %1220 = vrot.lane.b32.xlu0 %v1032, 84
        %v1221 = vpop.permute.xlu0 %1220
        %1222 = vrot.lane.b32.xlu0 %v1062, 84
        %v1223 = vpop.permute.xlu0 %1222
        %1224 = vrot.lane.b32.xlu0 %v1011, 84
        %v1225 = vpop.permute.xlu0 %1224
        %1234 = vrot.lane.b32.xlu0 %v1042, 96
        %v1235 = vpop.permute.xlu0 %1234
        %1236 = vrot.lane.b32.xlu0 %v1045, 96
        %v1237 = vpop.permute.xlu0 %1236
        %1238 = vrot.lane.b32.xlu0 %v1048, 96
        %v1239 = vpop.permute.xlu0 %1238
        %1240 = vrot.lane.b32.xlu0 %v1051, 96
        %v1241 = vpop.permute.xlu0 %1240
        %1242 = vrot.lane.b32.xlu0 %v1054, 96
        %v1243 = vpop.permute.xlu0 %1242
        %1244 = vrot.lane.b32.xlu0 %v1057, 96
        %v1245 = vpop.permute.xlu0 %1244
        %1246 = vrot.lane.b32.xlu0 %v1065, 96
        %v1247 = vpop.permute.xlu0 %1246
        %1248 = vrot.lane.b32.xlu0 %v1036, 96
        %v1249 = vpop.permute.xlu0 %1248
        %v1258 = vsel %vm600, %v974, %v1067
        %v1259 = vsel %vm600, %v975, %v1069
        %v1260 = vsel %vm600, %v976, %v1071
        %v1261 = vsel %vm600, %v977, %v1073
        %v1262 = vsel %vm600, %v978, %v1075
        %v1263 = vsel %vm600, %v979, %v1077
        %v1264 = vsel %vm600, %v980, %v1079
        %v1265 = vsel %vm600, %v981, %v1081
        %vm1266 = vcmask 195584
        %v1267 = vsel %vm1266, %v1258, %v1091
        %v1268 = vsel %vm1266, %v1259, %v1093
        %v1269 = vsel %vm1266, %v1260, %v1095
        %v1270 = vsel %vm1266, %v1261, %v1097
        %v1271 = vsel %vm1266, %v1262, %v1099
        %v1272 = vsel %vm1266, %v1263, %v1101
        %v1273 = vsel %vm1266, %v1264, %v1103
        %v1274 = vsel %vm1266, %v1265, %v1105
        %vm1275 = vcmask 293888
        %v1276 = vsel %vm1275, %v1267, %v1115
        %v1277 = vsel %vm1275, %v1268, %v1117
        %v1278 = vsel %vm1275, %v1269, %v1119
        %v1279 = vsel %vm1275, %v1270, %v1121
        %v1280 = vsel %vm1275, %v1271, %v1123
        %v1281 = vsel %vm1275, %v1272, %v1125
        %v1282 = vsel %vm1275, %v1273, %v1127
        %v1283 = vsel %vm1275, %v1274, %v1129
        %vm1284 = vcmask 392192
        %v1285 = vsel %vm1284, %v1276, %v1139
        %v1286 = vsel %vm1284, %v1277, %v1141
        %v1287 = vsel %vm1284, %v1278, %v1143
        %v1288 = vsel %vm1284, %v1279, %v1145
        %v1289 = vsel %vm1284, %v1280, %v1147
        %v1290 = vsel %vm1284, %v1281, %v1149
        %v1291 = vsel %vm1284, %v1282, %v1151
        %v1292 = vsel %vm1284, %v1283, %v1153
        %vm1293 = vcmask 490496
        %v1294 = vsel %vm1293, %v1285, %v1163
        %v1295 = vsel %vm1293, %v1286, %v1165
        %v1296 = vsel %vm1293, %v1287, %v1167
        %v1297 = vsel %vm1293, %v1288, %v1169
        %v1298 = vsel %vm1293, %v1289, %v1171
        %v1299 = vsel %vm1293, %v1290, %v1173
        %v1300 = vsel %vm1293, %v1291, %v1175
        %v1301 = vsel %vm1293, %v1292, %v1177
        %vm1302 = vcmask 588800
        %v1303 = vsel %vm1302, %v1294, %v1187
        %v1304 = vsel %vm1302, %v1295, %v1189
        %v1305 = vsel %vm1302, %v1296, %v1191
        %v1306 = vsel %vm1302, %v1297, %v1193
        %v1307 = vsel %vm1302, %v1298, %v1195
        %v1308 = vsel %vm1302, %v1299, %v1197
        %v1309 = vsel %vm1302, %v1300, %v1199
        %v1310 = vsel %vm1302, %v1301, %v1201
        %vm1311 = vcmask 687104
        %v1312 = vsel %vm1311, %v1303, %v1211
        %v1313 = vsel %vm1311, %v1304, %v1213
        %v1314 = vsel %vm1311, %v1305, %v1215
        %v1315 = vsel %vm1311, %v1306, %v1217
        %v1316 = vsel %vm1311, %v1307, %v1219
        %v1317 = vsel %vm1311, %v1308, %v1221
        %v1318 = vsel %vm1311, %v1309, %v1223
        %v1319 = vsel %vm1311, %v1310, %v1225
        %vm1320 = vcmask 785408
        %v1321 = vsel %vm1320, %v1312, %v1235
        %v1322 = vsel %vm1320, %v1313, %v1237
        %v1323 = vsel %vm1320, %v1314, %v1239
        %v1324 = vsel %vm1320, %v1315, %v1241
        %v1325 = vsel %vm1320, %v1316, %v1243
        %v1326 = vsel %vm1320, %v1317, %v1245
        %v1327 = vsel %vm1320, %v1318, %v1247
        %v1328 = vsel %vm1320, %v1319, %v1249
        %v1329 = vld [vmem:[%s5] sm:$0xff]
        %v1330 = vld [vmem:[%s5 + $0x8] sm:$0xff]
        %v1331 = vld [vmem:[%s5 + $0x10] sm:$0xff]
        %v1332 = vld [vmem:[%s5 + $0x18] sm:$0xff]
        %v1333 = vld [vmem:[%s5 + $0x20] sm:$0xff]
        %v1334 = vld [vmem:[%s5 + $0x28] sm:$0xff]
        %v1335 = vld [vmem:[%s5 + $0x30] sm:$0xff]
        %v1336 = vld [vmem:[%s5 + $0x38] sm:$0xff]
        %v1337 = vld [vmem:[%s5 + $0x40] sm:$0xff]
        %v1338 = vld [vmem:[%s5 + $0x48] sm:$0xff]
        %v1339 = vld [vmem:[%s5 + $0x50] sm:$0xff]
        %v1340 = vld [vmem:[%s5 + $0x58] sm:$0xff]
        %v1341 = vld [vmem:[%s5 + $0x60] sm:$0xff]
        %v1342 = vld [vmem:[%s5 + $0x68] sm:$0xf]
        %v1343 = vld [vmem:[%s6] sm:$0x1]
        %v1345 = vperm.slane %v1343, 0
        %vm1347 = vcmask 883712
        %v1349 = vsel %vm1347, %v1321, 0
        %v1352 = vsel %vm1347, %v1322, 0
        %v1355 = vsel %vm1347, %v1323, 0
        %v1358 = vsel %vm1347, %v1324, 0
        %v1361 = vsel %vm1347, %v1325, 0
        %v1364 = vsel %vm1347, %v1326, 0
        %v1367 = vsel %vm1347, %v1327, 0
        %v1370 = vsel %vm1347, %v1328, 0
        %v1373 = vsel %vm633, %v1342, 0
        %1375 = vmatpush.msra.mxu0 0.0
        %1376 = vmatpush.msra.mxu0 0.0
        %1377 = vmatpush.msra.mxu0 %v1373
        %1378 = vmatpush.msra.mxu0 %v1341
        %1379 = vmatpush.msra.mxu0 %v1340
        %1380 = vmatpush.msra.mxu0 %v1339
        %1381 = vmatpush.msra.mxu0 %v1338
        %1382 = vmatpush.msra.mxu0 %v1337
        %1383 = vmatpush.msra.mxu0 %v1336
        %1384 = vmatpush.msra.mxu0 %v1335
        %1385 = vmatpush.msra.mxu0 %v1334
        %1386 = vmatpush.msra.mxu0 %v1333
        %1387 = vmatpush.msra.mxu0 %v1332
        %1388 = vmatpush.msra.mxu0 %v1331
        %1389 = vmatpush.msra.mxu0 %v1330
        %1390 = vmatpush.msra.mxu0 %v1329
        %1391 = vmatmul.f32.gmra.mxu0 %v1349
        %v1392 = vpop.f32.mrf.mxu0
        %v1393 = vadd.f32 %v1345, %v1392
        %1394 = vmatmul.f32.gmra.mxu0 %v1352
        %v1395 = vpop.f32.mrf.mxu0
        %v1396 = vadd.f32 %v1345, %v1395
        %1397 = vmatmul.f32.gmra.mxu0 %v1355
        %v1398 = vpop.f32.mrf.mxu0
        %v1399 = vadd.f32 %v1345, %v1398
        %1400 = vmatmul.f32.gmra.mxu0 %v1358
        %v1401 = vpop.f32.mrf.mxu0
        %v1402 = vadd.f32 %v1345, %v1401
        %1403 = vmatmul.f32.gmra.mxu0 %v1361
        %v1404 = vpop.f32.mrf.mxu0
        %v1405 = vadd.f32 %v1345, %v1404
        %1406 = vmatmul.f32.gmra.mxu0 %v1364
        %v1407 = vpop.f32.mrf.mxu0
        %v1408 = vadd.f32 %v1345, %v1407
        %1409 = vmatmul.f32.gmra.mxu0 %v1367
        %v1410 = vpop.f32.mrf.mxu0
        %v1411 = vadd.f32 %v1345, %v1410
        %1412 = vmatmul.f32.gmra.mxu0 %v1370
        %v1413 = vpop.f32.mrf.mxu0
        %v1414 = vadd.f32 %v1345, %v1413
        %1415 = vdwg.mxu0
        %v1416 = vperm.slane %v944, 0
        %v1417 = vadd.f32 %v1393, %v1416
        %v1418 = vadd.f32 %v1396, %v1416
        %v1419 = vadd.f32 %v1399, %v1416
        %v1420 = vadd.f32 %v1402, %v1416
        %v1421 = vadd.f32 %v1405, %v1416
        %v1422 = vadd.f32 %v1408, %v1416
        %v1423 = vadd.f32 %v1411, %v1416
        %v1424 = vadd.f32 %v1414, %v1416
        %v1425 = vld [vmem:[%s8] sm:$0x1]
        %v1426 = vld [vmem:[%s9] sm:$0x1]
        %v1427 = vld [vmem:[%s10] sm:$0xff]
        %vm1428 = vcmask 64512
        %v1429 = vsel %vm1428, %v1417, 0.0
        %v1430 = vsel %vm1428, %v1418, 0.0
        %v1431 = vadd.f32 %v1429, %v1430
        %v1432 = vsel %vm1428, %v1419, 0.0
        %v1433 = vadd.f32 %v1431, %v1432
        %v1434 = vsel %vm1428, %v1420, 0.0
        %v1435 = vadd.f32 %v1433, %v1434
        %v1436 = vsel %vm1428, %v1421, 0.0
        %v1437 = vadd.f32 %v1435, %v1436
        %v1438 = vsel %vm1428, %v1422, 0.0
        %v1439 = vadd.f32 %v1437, %v1438
        %v1440 = vsel %vm1428, %v1423, 0.0
        %v1441 = vadd.f32 %v1439, %v1440
        %v1442 = vsel %vm1428, %v1424, 0.0
        %v1443 = vadd.f32 %v1441, %v1442
        %v1444 = vrot.slane %v1443, 4
        %v1445 = vadd.f32 %v1443, %v1444
        %v1446 = vrot.slane %v1445, 2
        %v1447 = vadd.f32 %v1445, %v1446
        %v1448 = vrot.slane %v1447, 1
        %v1449 = vadd.f32 %v1447, %v1448
        %v1450 = vmul.f32 %v1449, %v628
        %v1452 = vsel %vm1428, %v1450, 0
        %1454 = vmatpush.msra.mxu0 0.0
        %1455 = vmatpush.msra.mxu0 0.0
        %1456 = vmatpush.msra.mxu0 0.0
        %1457 = vmatpush.msra.mxu0 0.0
        %1458 = vmatpush.msra.mxu0 0.0
        %1459 = vmatpush.msra.mxu0 0.0
        %1460 = vmatpush.msra.mxu0 0.0
        %1461 = vmatpush.msra.mxu0 0.0
        %1462 = vmatpush.msra.mxu0 0.0
        %1463 = vmatpush.msra.mxu0 0.0
        %1464 = vmatpush.msra.mxu0 0.0
        %1465 = vmatpush.msra.mxu0 0.0
        %1466 = vmatpush.msra.mxu0 0.0
        %1467 = vmatpush.msra.mxu0 0.0
        %1468 = vmatpush.msra.mxu0 0.0
        %1469 = vmatpush.msra.mxu0 %v1427
        %1470 = vmatmul.f32.gmra.mxu0 %v1452
        %v1471 = vpop.f32.mrf.mxu0
        %v1472 = vadd.f32 0.0, %v1471
        %1473 = vdwg.mxu0
        %v1474 = vperm.slane %v1472, 0
        %v1475 = vsub.f32 %v1417, %v1474
        %v1476 = vsub.f32 %v1418, %v1474
        %v1477 = vsub.f32 %v1419, %v1474
        %v1478 = vsub.f32 %v1420, %v1474
        %v1479 = vsub.f32 %v1421, %v1474
        %v1480 = vsub.f32 %v1422, %v1474
        %v1481 = vsub.f32 %v1423, %v1474
        %v1482 = vsub.f32 %v1424, %v1474
        %v1483 = vmul.f32 %v1475, %v1475
        %v1484 = vmul.f32 %v1476, %v1476
        %v1485 = vmul.f32 %v1477, %v1477
        %v1486 = vmul.f32 %v1478, %v1478
        %v1487 = vmul.f32 %v1479, %v1479
        %v1488 = vmul.f32 %v1480, %v1480
        %v1489 = vmul.f32 %v1481, %v1481
        %v1490 = vmul.f32 %v1482, %v1482
        %v1491 = vsel %vm1428, %v1483, 0.0
        %v1492 = vsel %vm1428, %v1484, 0.0
        %v1493 = vadd.f32 %v1491, %v1492
        %v1494 = vsel %vm1428, %v1485, 0.0
        %v1495 = vadd.f32 %v1493, %v1494
        %v1496 = vsel %vm1428, %v1486, 0.0
        %v1497 = vadd.f32 %v1495, %v1496
        %v1498 = vsel %vm1428, %v1487, 0.0
        %v1499 = vadd.f32 %v1497, %v1498
        %v1500 = vsel %vm1428, %v1488, 0.0
        %v1501 = vadd.f32 %v1499, %v1500
        %v1502 = vsel %vm1428, %v1489, 0.0
        %v1503 = vadd.f32 %v1501, %v1502
        %v1504 = vsel %vm1428, %v1490, 0.0
        %v1505 = vadd.f32 %v1503, %v1504
        %v1506 = vrot.slane %v1505, 4
        %v1507 = vadd.f32 %v1505, %v1506
        %v1508 = vrot.slane %v1507, 2
        %v1509 = vadd.f32 %v1507, %v1508
        %v1510 = vrot.slane %v1509, 1
        %v1511 = vadd.f32 %v1509, %v1510
        %v1512 = vmul.f32 %v1511, %v628
        %v1514 = vsel %vm1428, %v1512, 0
        %1516 = vmatpush.msra.mxu0 0.0
        %1517 = vmatpush.msra.mxu0 0.0
        %1518 = vmatpush.msra.mxu0 0.0
        %1519 = vmatpush.msra.mxu0 0.0
        %1520 = vmatpush.msra.mxu0 0.0
        %1521 = vmatpush.msra.mxu0 0.0
        %1522 = vmatpush.msra.mxu0 0.0
        %1523 = vmatpush.msra.mxu0 0.0
        %1524 = vmatpush.msra.mxu0 0.0
        %1525 = vmatpush.msra.mxu0 0.0
        %1526 = vmatpush.msra.mxu0 0.0
        %1527 = vmatpush.msra.mxu0 0.0
        %1528 = vmatpush.msra.mxu0 0.0
        %1529 = vmatpush.msra.mxu0 0.0
        %1530 = vmatpush.msra.mxu0 0.0
        %1531 = vmatpush.msra.mxu0 %v1427
        %1532 = vmatmul.f32.gmra.mxu0 %v1514
        %v1533 = vpop.f32.mrf.mxu0
        %v1534 = vadd.f32 1e-05, %v1533
        %1535 = vdwg.mxu0
        %v1536 = vrsqrt.pop %v1534
        %v1537 = vmul.f32 %v1536, %v1534
        %v1538 = vmul.f32 %v1537, %v1536
        %v1539 = vmul.f32 0.5, %v1538
        %v1540 = vsub.f32 1.5, %v1539
        %v1541 = vmul.f32 %v1536, %v1540
        %vm1542 = vweird.f32 %v1534
        %vm1543 = vweird.f32 %v1536
        %vm1544 = vmor %vm1542, %vm1543
        %v1545 = vsel %vm1544, %v1536, %v1541
        %v1546 = vperm.slane %v1545, 0
        %v1547 = vmul.f32 %v1475, %v1546
        %v1548 = vmul.f32 %v1476, %v1546
        %v1549 = vmul.f32 %v1477, %v1546
        %v1550 = vmul.f32 %v1478, %v1546
        %v1551 = vmul.f32 %v1479, %v1546
        %v1552 = vmul.f32 %v1480, %v1546
        %v1553 = vmul.f32 %v1481, %v1546
        %v1554 = vmul.f32 %v1482, %v1546
        %v1556 = vperm.slane %v1425, 0
        %v1558 = vmul.f32 %v1547, %v1556
        %v1559 = vmul.f32 %v1548, %v1556
        %v1560 = vmul.f32 %v1549, %v1556
        %v1561 = vmul.f32 %v1550, %v1556
        %v1562 = vmul.f32 %v1551, %v1556
        %v1563 = vmul.f32 %v1552, %v1556
        %v1564 = vmul.f32 %v1553, %v1556
        %v1565 = vmul.f32 %v1554, %v1556
        %v1567 = vperm.slane %v1426, 0
        %v1569 = vadd.f32 %v1558, %v1567
        %v1570 = vadd.f32 %v1559, %v1567
        %v1571 = vadd.f32 %v1560, %v1567
        %v1572 = vadd.f32 %v1561, %v1567
        %v1573 = vadd.f32 %v1562, %v1567
        %v1574 = vadd.f32 %v1563, %v1567
        %v1575 = vadd.f32 %v1564, %v1567
        %v1576 = vadd.f32 %v1565, %v1567
        %v1577 = vxor.u32 %v1569, 2147483648
        %v1578 = vxor.u32 %v1570, 2147483648
        %v1579 = vxor.u32 %v1571, 2147483648
        %v1580 = vxor.u32 %v1572, 2147483648
        %v1581 = vxor.u32 %v1573, 2147483648
        %v1582 = vxor.u32 %v1574, 2147483648
        %v1583 = vxor.u32 %v1575, 2147483648
        %v1584 = vxor.u32 %v1576, 2147483648
        %v1585 = vmul.f32 %v1577, 1.442695
        %v1586 = vpow.pop %v1585
        %v1587 = vmul.f32 %v1578, 1.442695
        %v1588 = vpow.pop %v1587
        %v1589 = vmul.f32 %v1579, 1.442695
        %v1590 = vpow.pop %v1589
        %v1591 = vmul.f32 %v1580, 1.442695
        %v1592 = vpow.pop %v1591
        %v1593 = vmul.f32 %v1581, 1.442695
        %v1594 = vpow.pop %v1593
        %v1595 = vmul.f32 %v1582, 1.442695
        %v1596 = vpow.pop %v1595
        %v1597 = vmul.f32 %v1583, 1.442695
        %v1598 = vpow.pop %v1597
        %v1599 = vmul.f32 %v1584, 1.442695
        %v1600 = vpow.pop %v1599
        %v1601 = vadd.f32 %v1586, 1.0
        %v1602 = vadd.f32 %v1588, 1.0
        %v1603 = vadd.f32 %v1590, 1.0
        %v1604 = vadd.f32 %v1592, 1.0
        %v1605 = vadd.f32 %v1594, 1.0
        %v1606 = vadd.f32 %v1596, 1.0
        %v1607 = vadd.f32 %v1598, 1.0
        %v1608 = vadd.f32 %v1600, 1.0
        %v1609 = vrcp.pop %v1601
        %v1610 = vmul.f32 %v1601, %v1609
        %v1611 = vsub.f32 1.0, %v1610
        %v1612 = vmul.f32 %v1609, %v1611
        %v1613 = vadd.f32 %v1609, %v1612
        %vm1614 = vweird.f32 %v1601
        %vm1615 = vweird.f32 %v1609
        %vm1616 = vmor %vm1614, %vm1615
        %v1617 = vsel %vm1616, %v1609, %v1613
        %v1618 = vand.u32 2147483647, %v1601
        %vm1619 = vcmp.eq.f32.partialorder %v1618, 8.507059e+37
        %v1620 = vand.u32 %v1601, 2147483648
        %v1621 = vor.u32 1.1754944e-38, %v1620
        %v1622 = vsel %vm1619, %v1621, %v1617
        %v1623 = vmul.f32 1.0, %v1622
        %v1624 = vrcp.pop %v1602
        %v1625 = vmul.f32 %v1602, %v1624
        %v1626 = vsub.f32 1.0, %v1625
        %v1627 = vmul.f32 %v1624, %v1626
        %v1628 = vadd.f32 %v1624, %v1627
        %vm1629 = vweird.f32 %v1602
        %vm1630 = vweird.f32 %v1624
        %vm1631 = vmor %vm1629, %vm1630
        %v1632 = vsel %vm1631, %v1624, %v1628
        %v1633 = vand.u32 2147483647, %v1602
        %vm1634 = vcmp.eq.f32.partialorder %v1633, 8.507059e+37
        %v1635 = vand.u32 %v1602, 2147483648
        %v1636 = vor.u32 1.1754944e-38, %v1635
        %v1637 = vsel %vm1634, %v1636, %v1632
        %v1638 = vmul.f32 1.0, %v1637
        %v1639 = vrcp.pop %v1603
        %v1640 = vmul.f32 %v1603, %v1639
        %v1641 = vsub.f32 1.0, %v1640
        %v1642 = vmul.f32 %v1639, %v1641
        %v1643 = vadd.f32 %v1639, %v1642
        %vm1644 = vweird.f32 %v1603
        %vm1645 = vweird.f32 %v1639
        %vm1646 = vmor %vm1644, %vm1645
        %v1647 = vsel %vm1646, %v1639, %v1643
        %v1648 = vand.u32 2147483647, %v1603
        %vm1649 = vcmp.eq.f32.partialorder %v1648, 8.507059e+37
        %v1650 = vand.u32 %v1603, 2147483648
        %v1651 = vor.u32 1.1754944e-38, %v1650
        %v1652 = vsel %vm1649, %v1651, %v1647
        %v1653 = vmul.f32 1.0, %v1652
        %v1654 = vrcp.pop %v1604
        %v1655 = vmul.f32 %v1604, %v1654
        %v1656 = vsub.f32 1.0, %v1655
        %v1657 = vmul.f32 %v1654, %v1656
        %v1658 = vadd.f32 %v1654, %v1657
        %vm1659 = vweird.f32 %v1604
        %vm1660 = vweird.f32 %v1654
        %vm1661 = vmor %vm1659, %vm1660
        %v1662 = vsel %vm1661, %v1654, %v1658
        %v1663 = vand.u32 2147483647, %v1604
        %vm1664 = vcmp.eq.f32.partialorder %v1663, 8.507059e+37
        %v1665 = vand.u32 %v1604, 2147483648
        %v1666 = vor.u32 1.1754944e-38, %v1665
        %v1667 = vsel %vm1664, %v1666, %v1662
        %v1668 = vmul.f32 1.0, %v1667
        %v1669 = vrcp.pop %v1605
        %v1670 = vmul.f32 %v1605, %v1669
        %v1671 = vsub.f32 1.0, %v1670
        %v1672 = vmul.f32 %v1669, %v1671
        %v1673 = vadd.f32 %v1669, %v1672
        %vm1674 = vweird.f32 %v1605
        %vm1675 = vweird.f32 %v1669
        %vm1676 = vmor %vm1674, %vm1675
        %v1677 = vsel %vm1676, %v1669, %v1673
        %v1678 = vand.u32 2147483647, %v1605
        %vm1679 = vcmp.eq.f32.partialorder %v1678, 8.507059e+37
        %v1680 = vand.u32 %v1605, 2147483648
        %v1681 = vor.u32 1.1754944e-38, %v1680
        %v1682 = vsel %vm1679, %v1681, %v1677
        %v1683 = vmul.f32 1.0, %v1682
        %v1684 = vrcp.pop %v1606
        %v1685 = vmul.f32 %v1606, %v1684
        %v1686 = vsub.f32 1.0, %v1685
        %v1687 = vmul.f32 %v1684, %v1686
        %v1688 = vadd.f32 %v1684, %v1687
        %vm1689 = vweird.f32 %v1606
        %vm1690 = vweird.f32 %v1684
        %vm1691 = vmor %vm1689, %vm1690
        %v1692 = vsel %vm1691, %v1684, %v1688
        %v1693 = vand.u32 2147483647, %v1606
        %vm1694 = vcmp.eq.f32.partialorder %v1693, 8.507059e+37
        %v1695 = vand.u32 %v1606, 2147483648
        %v1696 = vor.u32 1.1754944e-38, %v1695
        %v1697 = vsel %vm1694, %v1696, %v1692
        %v1698 = vmul.f32 1.0, %v1697
        %v1699 = vrcp.pop %v1607
        %v1700 = vmul.f32 %v1607, %v1699
        %v1701 = vsub.f32 1.0, %v1700
        %v1702 = vmul.f32 %v1699, %v1701
        %v1703 = vadd.f32 %v1699, %v1702
        %vm1704 = vweird.f32 %v1607
        %vm1705 = vweird.f32 %v1699
        %vm1706 = vmor %vm1704, %vm1705
        %v1707 = vsel %vm1706, %v1699, %v1703
        %v1708 = vand.u32 2147483647, %v1607
        %vm1709 = vcmp.eq.f32.partialorder %v1708, 8.507059e+37
        %v1710 = vand.u32 %v1607, 2147483648
        %v1711 = vor.u32 1.1754944e-38, %v1710
        %v1712 = vsel %vm1709, %v1711, %v1707
        %v1713 = vmul.f32 1.0, %v1712
        %v1714 = vrcp.pop %v1608
        %v1715 = vmul.f32 %v1608, %v1714
        %v1716 = vsub.f32 1.0, %v1715
        %v1717 = vmul.f32 %v1714, %v1716
        %v1718 = vadd.f32 %v1714, %v1717
        %vm1719 = vweird.f32 %v1608
        %vm1720 = vweird.f32 %v1714
        %vm1721 = vmor %vm1719, %vm1720
        %v1722 = vsel %vm1721, %v1714, %v1718
        %v1723 = vand.u32 2147483647, %v1608
        %vm1724 = vcmp.eq.f32.partialorder %v1723, 8.507059e+37
        %v1725 = vand.u32 %v1608, 2147483648
        %v1726 = vor.u32 1.1754944e-38, %v1725
        %v1727 = vsel %vm1724, %v1726, %v1722
        %v1728 = vmul.f32 1.0, %v1727
        %v1729 = vmul.f32 %v1569, %v1623
        %v1730 = vmul.f32 %v1570, %v1638
        %v1731 = vmul.f32 %v1571, %v1653
        %v1732 = vmul.f32 %v1572, %v1668
        %v1733 = vmul.f32 %v1573, %v1683
        %v1734 = vmul.f32 %v1574, %v1698
        %v1735 = vmul.f32 %v1575, %v1713
        %v1736 = vmul.f32 %v1576, %v1728
        %v1745 = vrot.slane %v1729, 7
        %v1746 = vrot.slane %v1730, 7
        %v1747 = vrot.slane %v1731, 7
        %v1748 = vrot.slane %v1732, 7
        %v1749 = vrot.slane %v1733, 7
        %v1750 = vrot.slane %v1734, 7
        %v1751 = vrot.slane %v1735, 7
        %v1752 = vrot.slane %v1736, 7
        %v1761 = vsel %vm973, 0.0, %v1745
        %v1762 = vsel %vm973, 0.0, %v1746
        %v1763 = vsel %vm973, 0.0, %v1747
        %v1764 = vsel %vm973, 0.0, %v1748
        %v1765 = vsel %vm973, 0.0, %v1749
        %v1766 = vsel %vm973, 0.0, %v1750
        %v1767 = vsel %vm973, 0.0, %v1751
        %v1768 = vsel %vm973, 0.0, %v1752
        %v1769 = vsel %vm973, %v1745, 0.0
        %v1770 = vsel %vm973, %v1746, 0.0
        %v1771 = vsel %vm973, %v1747, 0.0
        %v1772 = vsel %vm973, %v1748, 0.0
        %v1773 = vsel %vm973, %v1749, 0.0
        %v1774 = vsel %vm973, %v1750, 0.0
        %v1775 = vsel %vm973, %v1751, 0.0
        %v1776 = vsel %vm973, %v1752, 0.0
        %v1791 = vrot.slane %v1761, 1
        %v1792 = vrot.slane %v1769, 1
        %v1793 = vsel %vm1008, %v1791, %v1792
        %v1794 = vrot.slane %v1762, 1
        %v1795 = vrot.slane %v1770, 1
        %v1796 = vsel %vm1008, %v1794, %v1795
        %v1797 = vrot.slane %v1763, 1
        %v1798 = vrot.slane %v1771, 1
        %v1799 = vsel %vm1008, %v1797, %v1798
        %v1800 = vrot.slane %v1764, 1
        %v1801 = vrot.slane %v1772, 1
        %v1802 = vsel %vm1008, %v1800, %v1801
        %v1803 = vrot.slane %v1765, 1
        %v1804 = vrot.slane %v1773, 1
        %v1805 = vsel %vm1008, %v1803, %v1804
        %v1806 = vrot.slane %v1766, 1
        %v1807 = vrot.slane %v1774, 1
        %v1808 = vsel %vm1008, %v1806, %v1807
        %v1809 = vrot.slane %v1767, 1
        %v1810 = vrot.slane %v1775, 1
        %v1811 = vsel %vm1008, %v1809, %v1810
        %v1812 = vrot.slane %v1761, 2
        %v1813 = vrot.slane %v1769, 2
        %v1814 = vsel %vm1033, %v1812, %v1813
        %v1815 = vrot.slane %v1762, 2
        %v1816 = vrot.slane %v1770, 2
        %v1817 = vsel %vm1033, %v1815, %v1816
        %v1818 = vrot.slane %v1763, 2
        %v1819 = vrot.slane %v1771, 2
        %v1820 = vsel %vm1033, %v1818, %v1819
        %v1821 = vrot.slane %v1764, 2
        %v1822 = vrot.slane %v1772, 2
        %v1823 = vsel %vm1033, %v1821, %v1822
        %v1824 = vrot.slane %v1765, 2
        %v1825 = vrot.slane %v1773, 2
        %v1826 = vsel %vm1033, %v1824, %v1825
        %v1827 = vrot.slane %v1766, 2
        %v1828 = vrot.slane %v1774, 2
        %v1829 = vsel %vm1033, %v1827, %v1828
        %v1830 = vrot.slane %v1767, 2
        %v1831 = vrot.slane %v1775, 2
        %v1832 = vsel %vm1033, %v1830, %v1831
        %v1835 = vrot.slane %v1768, 1
        %v1836 = vrot.slane %v1776, 1
        %v1837 = vsel %vm1008, %v1835, %v1836
        %v1838 = vrot.slane %v1768, 2
        %v1839 = vrot.slane %v1776, 2
        %v1840 = vsel %vm1033, %v1838, %v1839
        %1841 = vrot.lane.b32.xlu0 %v1011, 8
        %v1842 = vpop.permute.xlu0 %1841
        %1843 = vrot.lane.b32.xlu0 %v1793, 8
        %v1844 = vpop.permute.xlu0 %1843
        %1845 = vrot.lane.b32.xlu0 %v1796, 8
        %v1846 = vpop.permute.xlu0 %1845
        %1847 = vrot.lane.b32.xlu0 %v1799, 8
        %v1848 = vpop.permute.xlu0 %1847
        %1849 = vrot.lane.b32.xlu0 %v1802, 8
        %v1850 = vpop.permute.xlu0 %1849
        %1851 = vrot.lane.b32.xlu0 %v1805, 8
        %v1852 = vpop.permute.xlu0 %1851
        %1853 = vrot.lane.b32.xlu0 %v1808, 8
        %v1854 = vpop.permute.xlu0 %1853
        %1855 = vrot.lane.b32.xlu0 %v1811, 8
        %v1856 = vpop.permute.xlu0 %1855
        %1865 = vrot.lane.b32.xlu0 %v1036, 16
        %v1866 = vpop.permute.xlu0 %1865
        %1867 = vrot.lane.b32.xlu0 %v1814, 16
        %v1868 = vpop.permute.xlu0 %1867
        %1869 = vrot.lane.b32.xlu0 %v1817, 16
        %v1870 = vpop.permute.xlu0 %1869
        %1871 = vrot.lane.b32.xlu0 %v1820, 16
        %v1872 = vpop.permute.xlu0 %1871
        %1873 = vrot.lane.b32.xlu0 %v1823, 16
        %v1874 = vpop.permute.xlu0 %1873
        %1875 = vrot.lane.b32.xlu0 %v1826, 16
        %v1876 = vpop.permute.xlu0 %1875
        %1877 = vrot.lane.b32.xlu0 %v1829, 16
        %v1878 = vpop.permute.xlu0 %1877
        %1879 = vrot.lane.b32.xlu0 %v1832, 16
        %v1880 = vpop.permute.xlu0 %1879
        %1889 = vrot.lane.b32.xlu0 %v1761, 24
        %v1890 = vpop.permute.xlu0 %1889
        %1891 = vrot.lane.b32.xlu0 %v1762, 24
        %v1892 = vpop.permute.xlu0 %1891
        %1893 = vrot.lane.b32.xlu0 %v1763, 24
        %v1894 = vpop.permute.xlu0 %1893
        %1895 = vrot.lane.b32.xlu0 %v1764, 24
        %v1896 = vpop.permute.xlu0 %1895
        %1897 = vrot.lane.b32.xlu0 %v1765, 24
        %v1898 = vpop.permute.xlu0 %1897
        %1899 = vrot.lane.b32.xlu0 %v1766, 24
        %v1900 = vpop.permute.xlu0 %1899
        %1901 = vrot.lane.b32.xlu0 %v1767, 24
        %v1902 = vpop.permute.xlu0 %1901
        %1903 = vrot.lane.b32.xlu0 %v1768, 24
        %v1904 = vpop.permute.xlu0 %1903
        %1913 = vrot.lane.b32.xlu0 %v1793, 32
        %v1914 = vpop.permute.xlu0 %1913
        %1915 = vrot.lane.b32.xlu0 %v1796, 32
        %v1916 = vpop.permute.xlu0 %1915
        %1917 = vrot.lane.b32.xlu0 %v1799, 32
        %v1918 = vpop.permute.xlu0 %1917
        %1919 = vrot.lane.b32.xlu0 %v1802, 32
        %v1920 = vpop.permute.xlu0 %1919
        %1921 = vrot.lane.b32.xlu0 %v1805, 32
        %v1922 = vpop.permute.xlu0 %1921
        %1923 = vrot.lane.b32.xlu0 %v1808, 32
        %v1924 = vpop.permute.xlu0 %1923
        %1925 = vrot.lane.b32.xlu0 %v1811, 32
        %v1926 = vpop.permute.xlu0 %1925
        %1927 = vrot.lane.b32.xlu0 %v1837, 32
        %v1928 = vpop.permute.xlu0 %1927
        %1937 = vrot.lane.b32.xlu0 %v1814, 40
        %v1938 = vpop.permute.xlu0 %1937
        %1939 = vrot.lane.b32.xlu0 %v1817, 40
        %v1940 = vpop.permute.xlu0 %1939
        %1941 = vrot.lane.b32.xlu0 %v1820, 40
        %v1942 = vpop.permute.xlu0 %1941
        %1943 = vrot.lane.b32.xlu0 %v1823, 40
        %v1944 = vpop.permute.xlu0 %1943
        %1945 = vrot.lane.b32.xlu0 %v1826, 40
        %v1946 = vpop.permute.xlu0 %1945
        %1947 = vrot.lane.b32.xlu0 %v1829, 40
        %v1948 = vpop.permute.xlu0 %1947
        %1949 = vrot.lane.b32.xlu0 %v1832, 40
        %v1950 = vpop.permute.xlu0 %1949
        %1951 = vrot.lane.b32.xlu0 %v1840, 40
        %v1952 = vpop.permute.xlu0 %1951
        %1961 = vrot.lane.b32.xlu0 %v1762, 48
        %v1962 = vpop.permute.xlu0 %1961
        %1963 = vrot.lane.b32.xlu0 %v1763, 48
        %v1964 = vpop.permute.xlu0 %1963
        %1965 = vrot.lane.b32.xlu0 %v1764, 48
        %v1966 = vpop.permute.xlu0 %1965
        %1967 = vrot.lane.b32.xlu0 %v1765, 48
        %v1968 = vpop.permute.xlu0 %1967
        %1969 = vrot.lane.b32.xlu0 %v1766, 48
        %v1970 = vpop.permute.xlu0 %1969
        %1971 = vrot.lane.b32.xlu0 %v1767, 48
        %v1972 = vpop.permute.xlu0 %1971
        %1973 = vrot.lane.b32.xlu0 %v1768, 48
        %v1974 = vpop.permute.xlu0 %1973
        %1975 = vrot.lane.b32.xlu0 %v974, 48
        %v1976 = vpop.permute.xlu0 %1975
        %1985 = vrot.lane.b32.xlu0 %v1796, 56
        %v1986 = vpop.permute.xlu0 %1985
        %1987 = vrot.lane.b32.xlu0 %v1799, 56
        %v1988 = vpop.permute.xlu0 %1987
        %1989 = vrot.lane.b32.xlu0 %v1802, 56
        %v1990 = vpop.permute.xlu0 %1989
        %1991 = vrot.lane.b32.xlu0 %v1805, 56
        %v1992 = vpop.permute.xlu0 %1991
        %1993 = vrot.lane.b32.xlu0 %v1808, 56
        %v1994 = vpop.permute.xlu0 %1993
        %1995 = vrot.lane.b32.xlu0 %v1811, 56
        %v1996 = vpop.permute.xlu0 %1995
        %1997 = vrot.lane.b32.xlu0 %v1837, 56
        %v1998 = vpop.permute.xlu0 %1997
        %1999 = vrot.lane.b32.xlu0 %v1011, 56
        %v2000 = vpop.permute.xlu0 %1999
        %2009 = vrot.lane.b32.xlu0 %v1817, 64
        %v2010 = vpop.permute.xlu0 %2009
        %2011 = vrot.lane.b32.xlu0 %v1820, 64
        %v2012 = vpop.permute.xlu0 %2011
        %2013 = vrot.lane.b32.xlu0 %v1823, 64
        %v2014 = vpop.permute.xlu0 %2013
        %2015 = vrot.lane.b32.xlu0 %v1826, 64
        %v2016 = vpop.permute.xlu0 %2015
        %2017 = vrot.lane.b32.xlu0 %v1829, 64
        %v2018 = vpop.permute.xlu0 %2017
        %2019 = vrot.lane.b32.xlu0 %v1832, 64
        %v2020 = vpop.permute.xlu0 %2019
        %2021 = vrot.lane.b32.xlu0 %v1840, 64
        %v2022 = vpop.permute.xlu0 %2021
        %2023 = vrot.lane.b32.xlu0 %v1036, 64
        %v2024 = vpop.permute.xlu0 %2023
        %v2033 = vsel %vm1428, %v974, %v1842
        %v2034 = vsel %vm1428, %v1761, %v1844
        %v2035 = vsel %vm1428, %v1762, %v1846
        %v2036 = vsel %vm1428, %v1763, %v1848
        %v2037 = vsel %vm1428, %v1764, %v1850
        %v2038 = vsel %vm1428, %v1765, %v1852
        %v2039 = vsel %vm1428, %v1766, %v1854
        %v2040 = vsel %vm1428, %v1767, %v1856
        %v2041 = vsel %vm922, %v2033, %v1866
        %v2042 = vsel %vm922, %v2034, %v1868
        %v2043 = vsel %vm922, %v2035, %v1870
        %v2044 = vsel %vm922, %v2036, %v1872
        %v2045 = vsel %vm922, %v2037, %v1874
        %v2046 = vsel %vm922, %v2038, %v1876
        %v2047 = vsel %vm922, %v2039, %v1878
        %v2048 = vsel %vm922, %v2040, %v1880
        %v2049 = vsel %vm1266, %v2041, %v1890
        %v2050 = vsel %vm1266, %v2042, %v1892
        %v2051 = vsel %vm1266, %v2043, %v1894
        %v2052 = vsel %vm1266, %v2044, %v1896
        %v2053 = vsel %vm1266, %v2045, %v1898
        %v2054 = vsel %vm1266, %v2046, %v1900
        %v2055 = vsel %vm1266, %v2047, %v1902
        %v2056 = vsel %vm1266, %v2048, %v1904
        %vm2057 = vcmask 261120
        %v2058 = vsel %vm2057, %v2049, %v1914
        %v2059 = vsel %vm2057, %v2050, %v1916
        %v2060 = vsel %vm2057, %v2051, %v1918
        %v2061 = vsel %vm2057, %v2052, %v1920
        %v2062 = vsel %vm2057, %v2053, %v1922
        %v2063 = vsel %vm2057, %v2054, %v1924
        %v2064 = vsel %vm2057, %v2055, %v1926
        %v2065 = vsel %vm2057, %v2056, %v1928
        %vm2066 = vcmask 326656
        %v2067 = vsel %vm2066, %v2058, %v1938
        %v2068 = vsel %vm2066, %v2059, %v1940
        %v2069 = vsel %vm2066, %v2060, %v1942
        %v2070 = vsel %vm2066, %v2061, %v1944
        %v2071 = vsel %vm2066, %v2062, %v1946
        %v2072 = vsel %vm2066, %v2063, %v1948
        %v2073 = vsel %vm2066, %v2064, %v1950
        %v2074 = vsel %vm2066, %v2065, %v1952
        %v2075 = vsel %vm1284, %v2067, %v1962
        %v2076 = vsel %vm1284, %v2068, %v1964
        %v2077 = vsel %vm1284, %v2069, %v1966
        %v2078 = vsel %vm1284, %v2070, %v1968
        %v2079 = vsel %vm1284, %v2071, %v1970
        %v2080 = vsel %vm1284, %v2072, %v1972
        %v2081 = vsel %vm1284, %v2073, %v1974
        %v2082 = vsel %vm1284, %v2074, %v1976
        %vm2083 = vcmask 457728
        %v2084 = vsel %vm2083, %v2075, %v1986
        %v2085 = vsel %vm2083, %v2076, %v1988
        %v2086 = vsel %vm2083, %v2077, %v1990
        %v2087 = vsel %vm2083, %v2078, %v1992
        %v2088 = vsel %vm2083, %v2079, %v1994
        %v2089 = vsel %vm2083, %v2080, %v1996
        %v2090 = vsel %vm2083, %v2081, %v1998
        %v2091 = vsel %vm2083, %v2082, %v2000
        %vm2092 = vcmask 523264
        %v2093 = vsel %vm2092, %v2084, %v2010
        %v2094 = vsel %vm2092, %v2085, %v2012
        %v2095 = vsel %vm2092, %v2086, %v2014
        %v2096 = vsel %vm2092, %v2087, %v2016
        %v2097 = vsel %vm2092, %v2088, %v2018
        %v2098 = vsel %vm2092, %v2089, %v2020
        %v2099 = vsel %vm2092, %v2090, %v2022
        %v2100 = vsel %vm2092, %v2091, %v2024
        %2109 = vrot.lane.b32.xlu0 %v579, 72
        %v2110 = vpop.permute.xlu0 %2109
        %2111 = vrot.lane.b32.xlu0 %v580, 72
        %v2112 = vpop.permute.xlu0 %2111
        %2113 = vrot.lane.b32.xlu0 %v581, 72
        %v2114 = vpop.permute.xlu0 %2113
        %2115 = vrot.lane.b32.xlu0 %v582, 72
        %v2116 = vpop.permute.xlu0 %2115
        %2117 = vrot.lane.b32.xlu0 %v583, 72
        %v2118 = vpop.permute.xlu0 %2117
        %2119 = vrot.lane.b32.xlu0 %v584, 72
        %v2120 = vpop.permute.xlu0 %2119
        %2121 = vrot.lane.b32.xlu0 %v585, 72
        %v2122 = vpop.permute.xlu0 %2121
        %2123 = vrot.lane.b32.xlu0 %v586, 72
        %v2124 = vpop.permute.xlu0 %2123
        %v2133 = vsel %vm1302, %v2093, %v2110
        %v2134 = vsel %vm1302, %v2094, %v2112
        %v2135 = vsel %vm1302, %v2095, %v2114
        %v2136 = vsel %vm1302, %v2096, %v2116
        %v2137 = vsel %vm1302, %v2097, %v2118
        %v2138 = vsel %vm1302, %v2098, %v2120
        %v2139 = vsel %vm1302, %v2099, %v2122
        %v2140 = vsel %vm1302, %v2100, %v2124
        %v2141 = vld [vmem:[%s11] sm:$0xff]
        %v2142 = vld [vmem:[%s11 + $0x8] sm:$0xff]
        %v2143 = vld [vmem:[%s11 + $0x10] sm:$0xff]
        %v2144 = vld [vmem:[%s11 + $0x18] sm:$0xff]
        %v2145 = vld [vmem:[%s11 + $0x20] sm:$0xff]
        %v2146 = vld [vmem:[%s11 + $0x28] sm:$0xff]
        %v2147 = vld [vmem:[%s11 + $0x30] sm:$0xff]
        %v2148 = vld [vmem:[%s11 + $0x38] sm:$0xff]
        %v2149 = vld [vmem:[%s11 + $0x40] sm:$0xff]
        %v2150 = vld [vmem:[%s11 + $0x48] sm:$0xff]
        %v2151 = vld [vmem:[%s11 + $0x50] sm:$0xf]
        %v2152 = vld [vmem:[%s12] sm:$0x1]
        %v2154 = vperm.slane %v2152, 0
        %v2157 = vsel %vm1311, %v2133, 0
        %v2160 = vsel %vm1311, %v2134, 0
        %v2163 = vsel %vm1311, %v2135, 0
        %v2166 = vsel %vm1311, %v2136, 0
        %v2169 = vsel %vm1311, %v2137, 0
        %v2172 = vsel %vm1311, %v2138, 0
        %v2175 = vsel %vm1311, %v2139, 0
        %v2178 = vsel %vm1311, %v2140, 0
        %v2181 = vsel %vm633, %v2151, 0
        %2183 = vmatpush.msra.mxu0 0.0
        %2184 = vmatpush.msra.mxu0 0.0
        %2185 = vmatpush.msra.mxu0 0.0
        %2186 = vmatpush.msra.mxu0 0.0
        %2187 = vmatpush.msra.mxu0 0.0
        %2188 = vmatpush.msra.mxu0 %v2181
        %2189 = vmatpush.msra.mxu0 %v2150
        %2190 = vmatpush.msra.mxu0 %v2149
        %2191 = vmatpush.msra.mxu0 %v2148
        %2192 = vmatpush.msra.mxu0 %v2147
        %2193 = vmatpush.msra.mxu0 %v2146
        %2194 = vmatpush.msra.mxu0 %v2145
        %2195 = vmatpush.msra.mxu0 %v2144
        %2196 = vmatpush.msra.mxu0 %v2143
        %2197 = vmatpush.msra.mxu0 %v2142
        %2198 = vmatpush.msra.mxu0 %v2141
        %2199 = vmatmul.f32.gmra.mxu0 %v2157
        %v2200 = vpop.f32.mrf.mxu0
        %v2201 = vadd.f32 %v2154, %v2200
        %2202 = vmatmul.f32.gmra.mxu0 %v2160
        %v2203 = vpop.f32.mrf.mxu0
        %v2204 = vadd.f32 %v2154, %v2203
        %2205 = vmatmul.f32.gmra.mxu0 %v2163
        %v2206 = vpop.f32.mrf.mxu0
        %v2207 = vadd.f32 %v2154, %v2206
        %2208 = vmatmul.f32.gmra.mxu0 %v2166
        %v2209 = vpop.f32.mrf.mxu0
        %v2210 = vadd.f32 %v2154, %v2209
        %2211 = vmatmul.f32.gmra.mxu0 %v2169
        %v2212 = vpop.f32.mrf.mxu0
        %v2213 = vadd.f32 %v2154, %v2212
        %2214 = vmatmul.f32.gmra.mxu0 %v2172
        %v2215 = vpop.f32.mrf.mxu0
        %v2216 = vadd.f32 %v2154, %v2215
        %2217 = vmatmul.f32.gmra.mxu0 %v2175
        %v2218 = vpop.f32.mrf.mxu0
        %v2219 = vadd.f32 %v2154, %v2218
        %2220 = vmatmul.f32.gmra.mxu0 %v2178
        %v2221 = vpop.f32.mrf.mxu0
        %v2222 = vadd.f32 %v2154, %v2221
        %2223 = vdwg.mxu0
        %v2224 = vld [vmem:[%s13] sm:$0xff]
        %v2225 = vld [vmem:[%s14] sm:$0x1]
        %v2227 = vperm.slane %v2225, 0
        %v2230 = vsel %vm1428, %v2201, 0
        %v2233 = vsel %vm1428, %v2204, 0
        %v2236 = vsel %vm1428, %v2207, 0
        %v2239 = vsel %vm1428, %v2210, 0
        %v2242 = vsel %vm1428, %v2213, 0
        %v2245 = vsel %vm1428, %v2216, 0
        %v2248 = vsel %vm1428, %v2219, 0
        %v2251 = vsel %vm1428, %v2222, 0
        %2253 = vmatpush.msra.mxu0 0.0
        %2254 = vmatpush.msra.mxu0 0.0
        %2255 = vmatpush.msra.mxu0 0.0
        %2256 = vmatpush.msra.mxu0 0.0
        %2257 = vmatpush.msra.mxu0 0.0
        %2258 = vmatpush.msra.mxu0 0.0
        %2259 = vmatpush.msra.mxu0 0.0
        %2260 = vmatpush.msra.mxu0 0.0
        %2261 = vmatpush.msra.mxu0 0.0
        %2262 = vmatpush.msra.mxu0 0.0
        %2263 = vmatpush.msra.mxu0 0.0
        %2264 = vmatpush.msra.mxu0 0.0
        %2265 = vmatpush.msra.mxu0 0.0
        %2266 = vmatpush.msra.mxu0 0.0
        %2267 = vmatpush.msra.mxu0 0.0
        %2268 = vmatpush.msra.mxu0 %v2224
        %2269 = vmatmul.f32.gmra.mxu0 %v2230
        %v2270 = vpop.f32.mrf.mxu0
        %v2271 = vadd.f32 %v2227, %v2270
        %2272 = vmatmul.f32.gmra.mxu0 %v2233
        %v2273 = vpop.f32.mrf.mxu0
        %v2274 = vadd.f32 %v2227, %v2273
        %2275 = vmatmul.f32.gmra.mxu0 %v2236
        %v2276 = vpop.f32.mrf.mxu0
        %v2277 = vadd.f32 %v2227, %v2276
        %2278 = vmatmul.f32.gmra.mxu0 %v2239
        %v2279 = vpop.f32.mrf.mxu0
        %v2280 = vadd.f32 %v2227, %v2279
        %2281 = vmatmul.f32.gmra.mxu0 %v2242
        %v2282 = vpop.f32.mrf.mxu0
        %v2283 = vadd.f32 %v2227, %v2282
        %2284 = vmatmul.f32.gmra.mxu0 %v2245
        %v2285 = vpop.f32.mrf.mxu0
        %v2286 = vadd.f32 %v2227, %v2285
        %2287 = vmatmul.f32.gmra.mxu0 %v2248
        %v2288 = vpop.f32.mrf.mxu0
        %v2289 = vadd.f32 %v2227, %v2288
        %2290 = vmatmul.f32.gmra.mxu0 %v2251
        %v2291 = vpop.f32.mrf.mxu0
        %v2292 = vadd.f32 %v2227, %v2291
        %2293 = vdwg.mxu0
        %v2294 = vsel %vm1428, %v2271, 0.0
        %v2295 = vsel %vm1428, %v2274, 0.0
        %v2296 = vadd.f32 %v2294, %v2295
        %v2297 = vsel %vm1428, %v2277, 0.0
        %v2298 = vadd.f32 %v2296, %v2297
        %v2299 = vsel %vm1428, %v2280, 0.0
        %v2300 = vadd.f32 %v2298, %v2299
        %v2301 = vsel %vm1428, %v2283, 0.0
        %v2302 = vadd.f32 %v2300, %v2301
        %v2303 = vsel %vm1428, %v2286, 0.0
        %v2304 = vadd.f32 %v2302, %v2303
        %v2305 = vsel %vm1428, %v2289, 0.0
        %v2306 = vadd.f32 %v2304, %v2305
        %v2307 = vsel %vm1428, %v2292, 0.0
        %v2308 = vadd.f32 %v2306, %v2307
        %v2309 = vrot.slane %v2308, 4
        %v2310 = vadd.f32 %v2308, %v2309
        %v2311 = vrot.slane %v2310, 2
        %v2312 = vadd.f32 %v2310, %v2311
        %v2313 = vrot.slane %v2312, 1
        %v2314 = vadd.f32 %v2312, %v2313
        %v2315 = vld [vmem:[%s15] sm:$0xff]
        %v2316 = vld [vmem:[%s16] sm:$0x1]
        %v2318 = vsel %vm1428, %v2314, 0
        %2320 = vmatpush.msra.mxu0 0.0
        %2321 = vmatpush.msra.mxu0 0.0
        %2322 = vmatpush.msra.mxu0 0.0
        %2323 = vmatpush.msra.mxu0 0.0
        %2324 = vmatpush.msra.mxu0 0.0
        %2325 = vmatpush.msra.mxu0 0.0
        %2326 = vmatpush.msra.mxu0 0.0
        %2327 = vmatpush.msra.mxu0 0.0
        %2328 = vmatpush.msra.mxu0 0.0
        %2329 = vmatpush.msra.mxu0 0.0
        %2330 = vmatpush.msra.mxu0 0.0
        %2331 = vmatpush.msra.mxu0 0.0
        %2332 = vmatpush.msra.mxu0 0.0
        %2333 = vmatpush.msra.mxu0 0.0
        %2334 = vmatpush.msra.mxu0 0.0
        %2335 = vmatpush.msra.mxu0 %v2315
        %2336 = vmatmul.f32.gmra.mxu0 %v2318
        %v2337 = vpop.f32.mrf.mxu0
        %v2338 = vadd.f32 %v2316, %v2337
        %2339 = vdwg.mxu0
        %v2340 = vperm.slane %v2338, 0
        %v2341 = vadd.f32 %v2201, %v2340
        %v2342 = vadd.f32 %v2204, %v2340
        %v2343 = vadd.f32 %v2207, %v2340
        %v2344 = vadd.f32 %v2210, %v2340
        %v2345 = vadd.f32 %v2213, %v2340
        %v2346 = vadd.f32 %v2216, %v2340
        %v2347 = vadd.f32 %v2219, %v2340
        %v2348 = vadd.f32 %v2222, %v2340
        %2349 = vxpose.xlu0.b32.start [1/16] %v2341, 128
        %2350 = vxpose.xlu0.b32.cont [2/16] %v2342, 128
        %2351 = vxpose.xlu0.b32.cont [3/16] %v2343, 128
        %2352 = vxpose.xlu0.b32.cont [4/16] %v2344, 128
        %2353 = vxpose.xlu0.b32.cont [5/16] %v2345, 128
        %2354 = vxpose.xlu0.b32.cont [6/16] %v2346, 128
        %2355 = vxpose.xlu0.b32.cont [7/16] %v2347, 128
        %2356 = vxpose.xlu0.b32.cont [8/16] %v2348, 128
        %2357 = vxpose.xlu0.b32.cont [9/16] 0.0, 128
        %2358 = vxpose.xlu0.b32.cont [10/16] 0.0, 128
        %2359 = vxpose.xlu0.b32.cont [11/16] 0.0, 128
        %2360 = vxpose.xlu0.b32.cont [12/16] 0.0, 128
        %2361 = vxpose.xlu0.b32.cont [13/16] 0.0, 128
        %2362 = vxpose.xlu0.b32.cont [14/16] 0.0, 128
        %2363 = vxpose.xlu0.b32.cont [15/16] 0.0, 128
        %2364 = vxpose.xlu0.b32.end [16/16] 0.0, 128
        %v2365 = vpop.trf.xlu0
        %v2366 = vpop.trf.xlu0
        %v2367 = vpop.trf.xlu0
        %v2368 = vpop.trf.xlu0
        %v2369 = vpop.trf.xlu0
        %v2370 = vpop.trf.xlu0
        %v2371 = vpop.trf.xlu0
        %v2372 = vpop.trf.xlu0
        %v2373 = vpop.trf.xlu0
        %v2374 = vpop.trf.xlu0
        %v2375 = vpop.trf.xlu0
        %v2376 = vpop.trf.xlu0
        %v2377 = vpop.trf.xlu0
        %v2378 = vpop.trf.xlu0
        %v2379 = vpop.trf.xlu0
        %v2380 = vpop.trf.xlu0
        %2381 = vst.msk [vmem:[%s552] sm:$0xff] %vm2092, %v2365
        %s2382 = sand.u32 %s406, 1
        %s2383 = scalar_lea.sflag [#allocation3], %s2382
        %s2384 = sand.u32 %s406, 1
        %s2385 = smul.addr %s2384, 8
        %s2386 = scalar_lea.vmem [#allocation2], %s2385
        // Predicated region
        $region89: #{tpu_custom_call.1} parent=87 // pred_check
          %p2387 = pneg %p416
        $region90: #{tpu_custom_call.1} parent=87 // pred_check_branch
          %2389 = sbr.rel (%p2387) target = $region92
        $region91: #{tpu_custom_call.1} parent=87 // pred_region
          %2391 = vsyncadd %s2383, 0
          %s2392 = smul.addr %s31, 8
          %s2393 = scalar_lea.hbm %s17, %s2392
          %s2395 = sshll.u32 %s2386, 4
          %s2396 = int_to_ptr.vmem [resolvable:$true] %s2395
          %s2397 = sshll.u32 %s2393, 4
          %s2398 = int_to_ptr.hbm [resolvable:$true] %s2397
          %2400 = dma.vmem_to_hbm [thread:$0]  %s2396, 128, %s2398, %s2383
        $region92: #{tpu_custom_call.1} parent=87 // pred_fallthru
          _
      $region88: #{tpu_custom_call.1} parent=5 // pred_fallthru
        _
      %p2401 = scmp.le.s32.totalorder 2, %s26
      // Predicated region
      $region93: #{tpu_custom_call.1} parent=5 // pred_check
        %p2402 = pneg %p2401
      $region94: #{tpu_custom_call.1} parent=5 // pred_check_branch
        %2404 = sbr.rel (%p2402) target = $region96
      $region95: #{tpu_custom_call.1} parent=5 // pred_region
        %s2405 = ssub.s32 %s26, 2
        // Predicated region
        $region97: #{tpu_custom_call.1} parent=95 // pred_check
          %p2406 = pneg %p422
        $region98: #{tpu_custom_call.1} parent=95 // pred_check_branch
          %2408 = sbr.rel (%p2406) target = $region100
        $region99: #{tpu_custom_call.1} parent=95 // pred_region
          %s2409 = sand.u32 %s407, 1
          %s2410 = scalar_lea.sflag [#allocation3], %s2409
          %s2411 = sand.u32 %s407, 1
          %s2412 = smul.addr %s2411, 8
          %s2413 = scalar_lea.vmem [#allocation2], %s2412
          %2415 = dma.done %s2410, 128
        $region100: #{tpu_custom_call.1} parent=95 // pred_fallthru
          _
      $region96: #{tpu_custom_call.1} parent=5 // pred_fallthru
        _
    $region6: #{tpu_custom_call.1} parent=1 // loop_footer
      %s30 = sadd.s32 1, %s26
    $region7: #{tpu_custom_call.1} parent=1 // loop_footer_branch
      %25 = sbr.rel target = $region3
    $region8: #{tpu_custom_call.1} parent=1 // loop_exit
      _
    %2416 = vsyncpa [#allocation3], 1
    %s2417 = scalar_lea.sflag [#allocation3], 1
    %2418 = vsyncpa %s2417, 1

</llo_original>
